<compile_context>
chip_gen: v7x
topology: tpu7x:2x2x1
jax: 0.10.0
libtpu: 0.0.40
codegen_flags: <defaults>
</compile_context>

<pallas_src>
import functools

import jax
import jax.numpy as jnp
from jax import lax
from jax.experimental import pallas as pl
from jax.experimental.pallas import tpu as pltpu


# ----------------------------- Pallas kernel -----------------------------

def self_block_kernel(
    ts,            # static: strip (source-row block) size for the streamed softmax
    patches_ref,   # (1, N, K1) bf16   K1 = C_in*9
    w1_ref,        # (K1, C)    bf16   conv1 weight, (in, out) form
    wfgh_ref,      # (C, F)     bf16   fused [f | g | Wh^T w2] weights, F = 2*C8 + 1
    bias_ref,      # (2, LB)    f32    row0[:C] = b1, row1[:F] = [bf | bg | bh.w2]
    w2_ref,        # (1, C)     f32    conv2 weight row (residual path)
    scal_ref,      # (2,)       f32    SMEM scalars: [gamma, b2]
    out_ref,       # (1, 1, N)  f32
    f_scr,         # (N, C8)    bf16   scratch: f rows, sliced per strip
    hw_scr,        # (N, 1)     f32    scratch: hw[j] = h[j].w2 (value path collapsed to 1 ch)
    acc_ref,       # (1, N)     f32    scratch: lane-dense attention-output accumulator
):
    C = w1_ref.shape[1]
    F = wfgh_ref.shape[1]
    C8 = f_scr.shape[1]
    N = patches_ref.shape[1]
    n_strips = N // ts

    b1 = bias_ref[0:1, :C]                                               # (1, C)
    bfgh = bias_ref[1:2, :F]                                             # (1, F)

    # conv1 (3x3, pad=1) == patches @ W1 + b1 ; bf16 MXU operands, f32 accumulate.
    x1 = jnp.dot(patches_ref[0], w1_ref[...],
                 preferred_element_type=jnp.float32) + b1                # (N, C) f32

    # Residual path fused through conv2: res[0, i] = sum_c w2[c] * x1[i, c] (lane-dense (1, N)).
    res = lax.dot_general(w2_ref[...], x1,
                          dimension_numbers=(((1,), (1,)), ((), ())),
                          preferred_element_type=jnp.float32)            # (1, N) f32

    # Fused 1x1 projections [f | g | hw]: one bf16 matmul, one bias add.
    # hw = h . w2 is conv2 folded through the value path (exact algebra):
    #   out_att[i] = sum_j softmax_j(scores)[j, i] * hw[j]
    fgh = jnp.dot(x1.astype(jnp.bfloat16), wfgh_ref[...],
                  preferred_element_type=jnp.float32) + bfgh             # (N, F) f32

    fg16 = fgh[:, :2 * C8].astype(jnp.bfloat16)                          # cast once, then slice
    g16 = fg16[:, C8:]                                                   # (N, C8) bf16 (loop-invariant)
    f_scr[...] = fg16[:, :C8]                                            # (N, C8) bf16
    hw_scr[...] = fgh[:, 2 * C8:2 * C8 + 1]                              # (N, 1) f32

    acc_ref[...] = jnp.zeros_like(acc_ref)

    # Stream over strips of source rows j: each strip holds its full softmax row, so the
    # normalization completes inside the strip and folds straight into the (1, N) output
    # accumulator. The (N, N) e matrix is never materialized or written back.
    @pl.loop(0, n_strips)
    def _(s):
        r0 = pl.multiple_of(s * ts, ts)
        f_s = f_scr[pl.ds(r0, ts), :]                                    # (ts, C8) bf16
        # scores[j, i] = f[j] . g[i]  (contract last dims -> MXU-natural, no transposes)
        sc = lax.dot_general(f_s, g16,
                             dimension_numbers=(((1,), (1,)), ((), ())),
                             preferred_element_type=jnp.float32)         # (ts, N) f32
        mx = jnp.max(sc, axis=-1, keepdims=True)                         # (ts, 1)
        e = jnp.exp(sc - mx)                                             # f32 softmax numerator
        denom = jnp.sum(e, axis=-1, keepdims=True)                       # (ts, 1)
        coeff = hw_scr[pl.ds(r0, ts), :] * pl.reciprocal(denom, approx=True)   # (ts, 1)
        # Column-wise weighted sum over this strip's rows (VPU mul + sublane reduce).
        acc_ref[...] += jnp.sum(e * coeff, axis=0, keepdims=True)        # (1, N)

    gamma = scal_ref[0]
    b2 = scal_ref[1]
    out_ref[0] = (gamma * acc_ref[...] + res + b2).astype(out_ref.dtype)


# ----------------------------- wrapper -----------------------------------

def _im2col_3x3(x):
    """x: (B, C_in, H, W) NCHW -> patches (B, H*W, C_in*9); order matches torch weight flatten."""
    B, C, H, W = x.shape
    xp = jnp.pad(x, ((0, 0), (0, 0), (1, 1), (1, 1)))
    cols = []
    for ky in range(3):
        for kx in range(3):
            cols.append(xp[:, :, ky:ky + H, kx:kx + W])                  # (B, C, H, W)
    patches = jnp.stack(cols, axis=2)                                    # (B, C, 9, H, W)
    patches = patches.transpose(0, 3, 4, 1, 2).reshape(B, H * W, C * 9)
    return patches


def _pick_strip_rows(n):
    # 128 rows/strip keeps per-strip temporaries small and matches v5e MXU tiles;
    # for very large N on v6e/v7x a 256-row strip is also reasonable.
    for t in (128, 64, 32, 16, 8):
        if n % t == 0:
            return t
    return n


@jax.jit
def self_block_forward(x, params):
    """x: (B, C_in, H, W) float32 NCHW. Returns (B, 1, H, W)."""
    B, C_in, H, W = x.shape
    N = H * W
    K1 = C_in * 9

    w1 = params["w1"]                       # (C_out, C_in, 3, 3)
    b1 = params["b1"]                       # (C_out,)
    wf, bf_ = params["wf"], params["bf"]    # (C8, C_out), (C8,)
    wg, bg = params["wg"], params["bg"]
    wh, bh = params["wh"], params["bh"]     # (C_out, C_out), (C_out,)
    gamma = params["gamma"]                 # scalar
    w2, b2 = params["w2"], params["b2"]     # (1, C_out), (1,)

    C_out = w1.shape[0]
    C8 = wf.shape[0]
    F = 2 * C8 + 1                          # [f | g | hw]

    # bf16 activations: halves the per-step streamed DMA, ~3x cheaper conv1 MXU pass.
    patches = _im2col_3x3(x).astype(jnp.bfloat16)                        # (B, N, K1)

    # Weight prep (pure layout glue, done once under jit):
    w1_t = w1.reshape(C_out, K1).T.astype(jnp.bfloat16)                  # (K1, C_out)
    hw_col = (w2 @ wh).T                                                 # (C_out, 1) = Wh^T w2^T
    wfgh_t = jnp.concatenate([wf.T, wg.T, hw_col], axis=1).astype(jnp.bfloat16)  # (C_out, F)
    w2_row = w2.reshape(1, C_out).astype(jnp.float32)                    # residual path stays f32

    # Stack b1 and the fused [bf | bg | bh.w2] bias into one lane-padded (2, LB) block.
    LB = ((max(C_out, F) + 127) // 128) * 128
    biases = jnp.zeros((2, LB), jnp.float32)
    biases = biases.at[0, :C_out].set(b1)
    biases = biases.at[1, :F].set(jnp.concatenate([bf_, bg, (w2 @ bh).reshape(1)]))

    # gamma and b2 travel as SMEM scalars (no padded VMEM tiles / extra DMAs).
    scalars = jnp.concatenate([gamma.reshape(1), b2.reshape(1)]).astype(jnp.float32)  # (2,)

    ts = _pick_strip_rows(N)
    full = lambda shape: pl.BlockSpec(shape, lambda b: (0,) * len(shape))

    out = pl.pallas_call(
        functools.partial(self_block_kernel, ts),
        out_shape=jax.ShapeDtypeStruct((B, 1, N), jnp.float32),
        grid_spec=pltpu.PrefetchScalarGridSpec(
            num_scalar_prefetch=0,
            grid=(B,),
            in_specs=[
                pl.BlockSpec((1, N, K1), lambda b: (b, 0, 0)),
                full((K1, C_out)),
                full((C_out, F)),
                full((2, LB)),
                full((1, C_out)),
                pl.BlockSpec(memory_space=pltpu.MemorySpace.SMEM),
            ],
            out_specs=pl.BlockSpec((1, 1, N), lambda b: (b, 0, 0)),
            scratch_shapes=[
                pltpu.VMEM((N, C8), jnp.bfloat16),   # f rows, sliced per strip
                pltpu.VMEM((N, 1), jnp.float32),     # hw = h . w2
                pltpu.VMEM((1, N), jnp.float32),     # lane-dense attention accumulator
            ],
        ),
        compiler_params=pltpu.CompilerParams(
            dimension_semantics=("parallel",),
            # Actual per-step footprint is ~1-2 MiB at these shapes; 32 MiB is ample and
            # stays safely inside v7x's 64 MiB physical VMEM per TensorCore.
            vmem_limit_bytes=32 * 1024 * 1024,
        ),
    )(patches, w1_t, wfgh_t, biases, w2_row, scalars)

    return out.reshape(B, 1, H, W)                                       # NCHW (B, 1, H, W)


# ----------------------------- reference (plain JAX, f32) ------------------

def self_block_reference(x, params):
    B, C_in, H, W = x.shape
    w1, b1 = params["w1"], params["b1"]
    wf, bf_ = params["wf"], params["bf"]
    wg, bg = params["wg"], params["bg"]
    wh, bh = params["wh"], params["bh"]
    gamma = params["gamma"]
    w2, b2 = params["w2"], params["b2"]
    C_out = w1.shape[0]

    patches = _im2col_3x3(x)                                              # (B, N, C_in*9)
    x1 = jnp.einsum("bnk,ok->bno", patches, w1.reshape(C_out, -1)) + b1   # (B, N, C)
    f = jnp.einsum("bnc,oc->bno", x1, wf) + bf_                           # (B, N, C8)
    g = jnp.einsum("bnc,oc->bno", x1, wg) + bg
    h = jnp.einsum("bnc,oc->bno", x1, wh) + bh                            # (B, N, C)
    att = jax.nn.softmax(jnp.einsum("bic,bjc->bij", f, g), axis=-1)       # (B, N, N)
    sa = jnp.einsum("bji,bjc->bic", att, h)                               # (B, N, C)
    m = gamma * sa + x1
    out = jnp.einsum("bnc,oc->bno", m, w2) + b2                           # (B, N, 1)
    return out.reshape(B, H, W, 1).transpose(0, 3, 1, 2)


# ----------------------------- param init ----------------------------------

def init_params(key, in_channels, out_channels):
    C8 = out_channels // 8
    ks = jax.random.split(key, 6)

    def xavier(k, shape, fan_in, fan_out):
        lim = (6.0 / (fan_in + fan_out)) ** 0.5
        return jax.random.uniform(k, shape, jnp.float32, -lim, lim)

    params = {
        # conv1: 3x3
        "w1": xavier(ks[0], (out_channels, in_channels, 3, 3),
                     in_channels * 9, out_channels * 9),
        "b1": jnp.zeros((out_channels,), jnp.float32),
        # attention 1x1 convs (xavier_uniform, zero bias, as in init_conv)
        "wf": xavier(ks[1], (C8, out_channels), out_channels, C8),
        "bf": jnp.zeros((C8,), jnp.float32),
        "wg": xavier(ks[2], (C8, out_channels), out_channels, C8),
        "bg": jnp.zeros((C8,), jnp.float32),
        "wh": xavier(ks[3], (out_channels, out_channels), out_channels, out_channels),
        "bh": jnp.zeros((out_channels,), jnp.float32),
        # torch __init__ sets gamma=0; use a nonzero deterministic value so the
        # attention path actually contributes to the output numerically.
        "gamma": jnp.array(0.1, jnp.float32),
        # conv2: 1x1, C -> 1
        "w2": xavier(ks[4], (1, out_channels), out_channels, 1),
        "b2": jnp.zeros((1,), jnp.float32),
    }
    return params


# ----------------------------- main ----------------------------------------

if __name__ == "__main__":
    B, C_in, H, W = 2, 4, 16, 16
    C_out = 32                      # must be a multiple of 8 (attention uses C_out // 8)

    key = jax.random.PRNGKey(0)
    kx, kp = jax.random.split(key)
    x = jax.random.normal(kx, (B, C_in, H, W), jnp.float32)
    params = init_params(kp, C_in, C_out)

    y = jax.block_until_ready(self_block_forward(x, params))
    y_ref = self_block_reference(x, params)

    assert y.shape == (B, 1, H, W), y.shape
    # Kernel uses bf16 MXU operands (f32 accumulation) for conv1 / projections / scores and
    # an approx reciprocal; the softmax numerator and residual path stay f32.
    assert jnp.allclose(y, y_ref, rtol=2e-2, atol=2e-2), float(jnp.max(jnp.abs(y - y_ref)))

    print("KERNEL_OK")
</pallas_src>

<mosaic_0001>
module attributes {stable_mosaic.version = 11 : i64} {
  func.func @self_block_kernel(%arg0: i32, %arg1: memref<1x256x36xbf16, #tpu.memory_space<vmem>>, %arg2: memref<36x32xbf16, #tpu.memory_space<vmem>>, %arg3: memref<32x9xbf16, #tpu.memory_space<vmem>>, %arg4: memref<2x128xf32, #tpu.memory_space<vmem>>, %arg5: memref<1x32xf32, #tpu.memory_space<vmem>>, %arg6: memref<2xf32, #tpu.memory_space<smem>>, %arg7: memref<1x1x256xf32, #tpu.memory_space<vmem>>, %arg8: memref<256x4xbf16, #tpu.memory_space<vmem>>, %arg9: memref<256x1xf32, #tpu.memory_space<vmem>>, %arg10: memref<1x256xf32, #tpu.memory_space<vmem>>) attributes {dimension_semantics = [#tpu.dimension_semantics<parallel>], iteration_bounds = array<i64: 2>, scalar_prefetch = 0 : i64, scratch_operands = 3 : i64, tpu.core_type = #tpu.core_type<tc>, window_params = [{transform_indices = @transform_0, window_bounds = array<i64: 1, 256, 36>}, {pipeline_mode = #tpu.pipeline_mode<synchronous>, transform_indices = @transform_1, window_bounds = array<i64: 36, 32>}, {pipeline_mode = #tpu.pipeline_mode<synchronous>, transform_indices = @transform_2, window_bounds = array<i64: 32, 9>}, {pipeline_mode = #tpu.pipeline_mode<synchronous>, transform_indices = @transform_3, window_bounds = array<i64: 2, 128>}, {pipeline_mode = #tpu.pipeline_mode<synchronous>, transform_indices = @transform_4, window_bounds = array<i64: 1, 32>}, {transform_indices = @transform_5, window_bounds = array<i64: 2>}, {transform_indices = @transform_6, window_bounds = array<i64: 1, 1, 256>}]} {
    %c0 = arith.constant 0 : index
    %c0_0 = arith.constant 0 : index
    %0 = vector.load %arg4[%c0, %c0_0] : memref<2x128xf32, #tpu.memory_space<vmem>>, vector<1x32xf32>
    %c1 = arith.constant 1 : index
    %c0_1 = arith.constant 0 : index
    %1 = vector.load %arg4[%c1, %c0_1] : memref<2x128xf32, #tpu.memory_space<vmem>>, vector<1x9xf32>
    %c0_2 = arith.constant 0 : index
    %c0_3 = arith.constant 0 : index
    %c0_4 = arith.constant 0 : index
    %2 = vector.load %arg1[%c0_2, %c0_3, %c0_4] : memref<1x256x36xbf16, #tpu.memory_space<vmem>>, vector<1x256x36xbf16>
    %3 = vector.shape_cast %2 : vector<1x256x36xbf16> to vector<256x36xbf16>
    %c0_5 = arith.constant 0 : index
    %c0_6 = arith.constant 0 : index
    %4 = vector.load %arg2[%c0_5, %c0_6] : memref<36x32xbf16, #tpu.memory_space<vmem>>, vector<36x32xbf16>
    %cst = arith.constant dense<0.000000e+00> : vector<256x32xf32>
    %5 = tpu.matmul %3, %4, %cst {dimension_numbers = #tpu.dot_dimension_numbers<[1], [0], [0], [1], [0, 0, 1, 1], [], []>} : vector<256x36xbf16>, vector<36x32xbf16>, vector<256x32xf32> -> vector<256x32xf32>
    %6 = vector.broadcast %0 : vector<1x32xf32> to vector<256x32xf32>
    %7 = arith.addf %5, %6 : vector<256x32xf32>
    %c0_7 = arith.constant 0 : index
    %c0_8 = arith.constant 0 : index
    %8 = vector.load %arg5[%c0_7, %c0_8] : memref<1x32xf32, #tpu.memory_space<vmem>>, vector<1x32xf32>
    %cst_9 = arith.constant dense<0.000000e+00> : vector<1x256xf32>
    %9 = tpu.matmul %8, %7, %cst_9 {dimension_numbers = #tpu.dot_dimension_numbers<[1], [1], [0], [0], [0, 0, 1, 0], [], []>} : vector<1x32xf32>, vector<256x32xf32>, vector<1x256xf32> -> vector<1x256xf32>
    %10 = arith.truncf %7 : vector<256x32xf32> to vector<256x32xbf16>
    %c0_10 = arith.constant 0 : index
    %c0_11 = arith.constant 0 : index
    %11 = vector.load %arg3[%c0_10, %c0_11] : memref<32x9xbf16, #tpu.memory_space<vmem>>, vector<32x9xbf16>
    %cst_12 = arith.constant dense<0.000000e+00> : vector<256x9xf32>
    %12 = tpu.matmul %10, %11, %cst_12 {dimension_numbers = #tpu.dot_dimension_numbers<[1], [0], [0], [1], [0, 0, 1, 1], [], []>} : vector<256x32xbf16>, vector<32x9xbf16>, vector<256x9xf32> -> vector<256x9xf32>
    %13 = vector.broadcast %1 : vector<1x9xf32> to vector<256x9xf32>
    %14 = arith.addf %12, %13 : vector<256x9xf32>
    %15 = vector.extract_strided_slice %14 {offsets = [0, 0], sizes = [256, 8], strides = [1, 1]} : vector<256x9xf32> to vector<256x8xf32>
    %16 = arith.truncf %15 : vector<256x8xf32> to vector<256x8xbf16>
    %17 = vector.extract_strided_slice %16 {offsets = [0, 4], sizes = [256, 4], strides = [1, 1]} : vector<256x8xbf16> to vector<256x4xbf16>
    %18 = vector.extract_strided_slice %16 {offsets = [0, 0], sizes = [256, 4], strides = [1, 1]} : vector<256x8xbf16> to vector<256x4xbf16>
    %c0_13 = arith.constant 0 : index
    %c0_14 = arith.constant 0 : index
    %19 = vector.load %arg8[%c0_13, %c0_14] : memref<256x4xbf16, #tpu.memory_space<vmem>>, vector<256x4xbf16>
    tpu.vector_store %arg8[%c0_13, %c0_14], %18 {strides = array<i32>} : memref<256x4xbf16, #tpu.memory_space<vmem>>, vector<256x4xbf16>,
    %20 = vector.extract_strided_slice %14 {offsets = [0, 8], sizes = [256, 1], strides = [1, 1]} : vector<256x9xf32> to vector<256x1xf32>
    %c0_15 = arith.constant 0 : index
    %c0_16 = arith.constant 0 : index
    %21 = vector.load %arg9[%c0_15, %c0_16] : memref<256x1xf32, #tpu.memory_space<vmem>>, vector<256x1xf32>
    tpu.vector_store %arg9[%c0_15, %c0_16], %20 {strides = array<i32>} : memref<256x1xf32, #tpu.memory_space<vmem>>, vector<256x1xf32>,
    %cst_17 = arith.constant 0.000000e+00 : f32
    %22 = vector.broadcast %cst_17 : f32 to vector<1x256xf32>
    %c0_18 = arith.constant 0 : index
    %c0_19 = arith.constant 0 : index
    %23 = vector.load %arg10[%c0_18, %c0_19] : memref<1x256xf32, #tpu.memory_space<vmem>>, vector<1x256xf32>
    tpu.vector_store %arg10[%c0_18, %c0_19], %22 {strides = array<i32>} : memref<1x256xf32, #tpu.memory_space<vmem>>, vector<1x256xf32>,
    %c0_i32 = arith.constant 0 : i32
    %c2_i32 = arith.constant 2 : i32
    %24 = arith.addi %c0_i32, %c2_i32 : i32
    %c1_i32 = arith.constant 1 : i32
    scf.for %arg11 = %c0_i32 to %24 step %c1_i32  : i32 {
      %c1_i32_28 = arith.constant 1 : i32
      %36 = arith.muli %arg11, %c1_i32_28 : i32
      %c0_i32_29 = arith.constant 0 : i32
      %37 = arith.addi %c0_i32_29, %36 : i32
      %c128_i32 = arith.constant 128 : i32
      %38 = arith.muli %37, %c128_i32 : i32
      %39 = tpu.assume_multiple %38, 128 : i32
      %40 = arith.index_cast %39 : i32 to index
      %c0_30 = arith.constant 0 : index
      %41 = vector.load %arg8[%40, %c0_30] : memref<256x4xbf16, #tpu.memory_space<vmem>>, vector<128x4xbf16>
      %cst_31 = arith.constant dense<0.000000e+00> : vector<128x256xf32>
      %42 = tpu.matmul %41, %17, %cst_31 {dimension_numbers = #tpu.dot_dimension_numbers<[1], [1], [0], [0], [0, 0, 1, 0], [], []>} : vector<128x4xbf16>, vector<256x4xbf16>, vector<128x256xf32> -> vector<128x256xf32>
      %cst_32 = arith.constant dense<0xFF800000> : vector<128xf32>
      %43 = vector.multi_reduction <maximumf>, %42, %cst_32 [1] : vector<128x256xf32> to vector<128xf32>
      %44 = vector.shape_cast %43 : vector<128xf32> to vector<128x1xf32>
      %45 = vector.broadcast %44 : vector<128x1xf32> to vector<128x256xf32>
      %46 = arith.subf %42, %45 : vector<128x256xf32>
      %47 = math.exp %46 : vector<128x256xf32>
      %cst_33 = arith.constant dense<0.000000e+00> : vector<128xf32>
      %48 = vector.multi_reduction <add>, %47, %cst_33 [1] : vector<128x256xf32> to vector<128xf32>
      %49 = vector.shape_cast %48 : vector<128xf32> to vector<128x1xf32>
      %50 = arith.index_cast %39 : i32 to index
      %c0_34 = arith.constant 0 : index
      %51 = vector.load %arg9[%50, %c0_34] : memref<256x1xf32, #tpu.memory_space<vmem>>, vector<128x1xf32>
      %52 = tpu.reciprocal %49 {approx = true} : vector<128x1xf32> -> vector<128x1xf32>
      %53 = arith.mulf %51, %52 : vector<128x1xf32>
      %c0_35 = arith.constant 0 : index
      %c0_36 = arith.constant 0 : index
      %54 = vector.load %arg10[%c0_35, %c0_36] : memref<1x256xf32, #tpu.memory_space<vmem>>, vector<1x256xf32>
      %55 = vector.broadcast %53 : vector<128x1xf32> to vector<128x256xf32>
      %56 = arith.mulf %47, %55 : vector<128x256xf32>
      %cst_37 = arith.constant dense<0.000000e+00> : vector<256xf32>
      %57 = vector.multi_reduction <add>, %56, %cst_37 [0] : vector<128x256xf32> to vector<256xf32>
      %58 = vector.shape_cast %57 : vector<256xf32> to vector<1x256xf32>
      %59 = arith.addf %54, %58 : vector<1x256xf32>
      %c0_38 = arith.constant 0 : index
      %c0_39 = arith.constant 0 : index
      %60 = vector.load %arg10[%c0_38, %c0_39] : memref<1x256xf32, #tpu.memory_space<vmem>>, vector<1x256xf32>
      tpu.vector_store %arg10[%c0_38, %c0_39], %59 {strides = array<i32>} : memref<1x256xf32, #tpu.memory_space<vmem>>, vector<1x256xf32>,
    }
    %c2_i32_20 = arith.constant 2 : i32
    %c0_21 = arith.constant 0 : index
    %25 = memref.load %arg6[%c0_21] : memref<2xf32, #tpu.memory_space<smem>>
    %c1_22 = arith.constant 1 : index
    %26 = memref.load %arg6[%c1_22] : memref<2xf32, #tpu.memory_space<smem>>
    %c0_23 = arith.constant 0 : index
    %c0_24 = arith.constant 0 : index
    %27 = vector.load %arg10[%c0_23, %c0_24] : memref<1x256xf32, #tpu.memory_space<vmem>>, vector<1x256xf32>
    %28 = vector.broadcast %25 : f32 to vector<1x256xf32>
    %29 = arith.mulf %28, %27 : vector<1x256xf32>
    %30 = arith.addf %29, %9 : vector<1x256xf32>
    %31 = vector.broadcast %26 : f32 to vector<1x256xf32>
    %32 = arith.addf %30, %31 : vector<1x256xf32>
    %c0_25 = arith.constant 0 : index
    %c0_26 = arith.constant 0 : index
    %c0_27 = arith.constant 0 : index
    %33 = vector.load %arg7[%c0_25, %c0_26, %c0_27] : memref<1x1x256xf32, #tpu.memory_space<vmem>>, vector<1x1x256xf32>
    %34 = vector.shape_cast %33 : vector<1x1x256xf32> to vector<1x256xf32>
    %35 = vector.shape_cast %32 : vector<1x256xf32> to vector<1x1x256xf32>
    tpu.vector_store %arg7[%c0_25, %c0_26, %c0_27], %35 {strides = array<i32>} : memref<1x1x256xf32, #tpu.memory_space<vmem>>, vector<1x1x256xf32>,
    return
  }
  func.func @transform_0(%arg0: i32) -> (i32, i32, i32) {
    %c0_i32 = arith.constant 0 : i32
    %c0_i32_0 = arith.constant 0 : i32
    %c0_i32_1 = arith.constant 0 : i32
    return %arg0, %c0_i32, %c0_i32_0 : i32, i32, i32
  }
  func.func @transform_1(%arg0: i32) -> (i32, i32) {
    %c0_i32 = arith.constant 0 : i32
    %c0_i32_0 = arith.constant 0 : i32
    %c0_i32_1 = arith.constant 0 : i32
    return %c0_i32, %c0_i32_0 : i32, i32
  }
  func.func @transform_2(%arg0: i32) -> (i32, i32) {
    %c0_i32 = arith.constant 0 : i32
    %c0_i32_0 = arith.constant 0 : i32
    %c0_i32_1 = arith.constant 0 : i32
    return %c0_i32, %c0_i32_0 : i32, i32
  }
  func.func @transform_3(%arg0: i32) -> (i32, i32) {
    %c0_i32 = arith.constant 0 : i32
    %c0_i32_0 = arith.constant 0 : i32
    %c0_i32_1 = arith.constant 0 : i32
    return %c0_i32, %c0_i32_0 : i32, i32
  }
  func.func @transform_4(%arg0: i32) -> (i32, i32) {
    %c0_i32 = arith.constant 0 : i32
    %c0_i32_0 = arith.constant 0 : i32
    %c0_i32_1 = arith.constant 0 : i32
    return %c0_i32, %c0_i32_0 : i32, i32
  }
  func.func @transform_5(%arg0: i32) -> i32 {
    %c0_i32 = arith.constant 0 : i32
    %c0_i32_0 = arith.constant 0 : i32
    return %c0_i32 : i32
  }
  func.func @transform_6(%arg0: i32) -> (i32, i32, i32) {
    %c0_i32 = arith.constant 0 : i32
    %c0_i32_0 = arith.constant 0 : i32
    %c0_i32_1 = arith.constant 0 : i32
    return %arg0, %c0_i32, %c0_i32_0 : i32, i32, i32
  }
}

</mosaic_0001>

<llo_original>
// kernel: self_block_forward.1
$region0: #{self_block_forward.1}
  #allocation0 [shape = 'u32[]', space=smem, size = 0x4, offset = 0x4, fixed_abs, tag = 'smem constant byte address 0x4 - core index']
  #allocation1 [shape = 'u32[144,128]{1,0:T(1,128)}', space=vmem, size = 0x12000, scoped, tag = 'internal scratch']
  #allocation2 [shape = 'bf16[256,4]{1,0:T(16,128)(2,1)}', space=vmem, size = 0x10000, scoped, tag = 'scratch operand']
  #allocation3 [shape = 'f32[256,1]{1,0:T(8,128)}', space=vmem, size = 0x20000, scoped, tag = 'scratch operand']
  #allocation4 [shape = 'f32[1,256]{1,0:T(1,128)}', space=vmem, size = 0x400, scoped, tag = 'scratch operand']
  %s0 = inlined_call_operand.vmem [shape: bf16[2,256,36], index: 0, kind: input, shape index: {}]
  %s1 = inlined_call_operand.vmem [shape: bf16[36,32], index: 1, kind: input, shape index: {}]
  %s2 = inlined_call_operand.vmem [shape: bf16[32,9], index: 2, kind: input, shape index: {}]
  %s3 = inlined_call_operand.vmem [shape: f32[2,128], index: 3, kind: input, shape index: {}]
  %s4 = inlined_call_operand.vmem [shape: f32[1,32], index: 4, kind: input, shape index: {}]
  %s5 = inlined_call_operand.vmem [shape: f32[2], index: 5, kind: input, shape index: {}]
  %s6 = inlined_call_operand.vmem [shape: f32[2,1,256], index: 6, kind: output, shape index: {}]
  %s7 = sld [smem:[#allocation0]]
  $region68: #{self_block_forward.1} parent=0
    _
  %s9 = ssub.s32 1, %s7
  %s10 = scalar_select 0, %s9, %s7
  $region1: #{self_block_forward.1} parent=0
    #allocation5 [shape = 'u8[512]{0}', space=smem, size = 0x200, scoped, tag = 'input window, operand 5, single buffered']
    #allocation6 [shape = 's32[2]{0}', space=sflag, size = 0x8, scoped, tag = 'scoped memory for self_block_forward.1']
    %11 = vsyncpa [#allocation6], 0
    loop: start=0, step=1, limit=4
    $region2: #{self_block_forward.1} parent=1 // loop_pre_header
      _
    $region3: #{self_block_forward.1} parent=1 // loop_header
      %s13 = sphi 0, %s17
      %p14 = scmp.ge.s32.totalorder %s13, 4
      %s23 = sphi 0, %s25
      %s26 = sphi 0, %s23
      %s27 = sphi 0, %s26
      %s43 = sphi 0, %s27
      %s47 = sphi 0, %s47
      %s49 = sphi 0, %s47
      %s50 = sphi 0, %s49
      %s64 = sphi 0, %s50
      %s68 = sphi 0, %s68
      %s70 = sphi 0, %s68
      %s71 = sphi 0, %s70
      %s85 = sphi 0, %s71
      %s89 = sphi 0, %s89
      %s91 = sphi 0, %s89
      %s92 = sphi 0, %s91
      %s106 = sphi 0, %s92
      %s110 = sphi 0, %s110
      %s112 = sphi 0, %s110
      %s113 = sphi 0, %s112
      %s127 = sphi 0, %s113
      %s131 = sphi 0, %s131
      %s133 = sphi 0, %s131
      %s134 = sphi 0, %s133
      %s148 = sphi 0, %s134
      %s154 = sphi 0, %s156
      %s157 = sphi 0, %s154
      %s158 = sphi 0, %s157
      %s174 = sphi 0, %s158
    $region4: #{self_block_forward.1} parent=1 // loop_header_branch
      %16 = sbr.rel (%p14) target = $region8
    $region5: #{self_block_forward.1} parent=1 // loop_body
      %s18 = ssub.s32 %s13, 1
      %s19 = ssub.s32 %s13, 2
      %s20 = sadd.s32 %s13, 1
      %s21 = ssub.s32 %s13, %s20
      %p22 = scmp.eq.s32.totalorder %s21, 0
      %s24 = sadd.s32 %s23, 1
      %s25 = scalar_select %p22, %s23, %s24
      %p28 = pneg %p22
      %p29 = scmp.eq.s32.totalorder %s13, 1
      %p30 = por %p28, %p29
      %p31 = scmp.ne.s32.totalorder %s23, %s26
      %p32 = scmp.eq.s32.totalorder %s13, 0
      %p33 = por %p31, %p32
      %p34 = scmp.ne.s32.totalorder %s23, %s26
      %p35 = scmp.eq.s32.totalorder %s18, 1
      %p36 = por %p34, %p35
      %p37 = scmp.ne.s32.totalorder %s26, %s27
      %p38 = scmp.eq.s32.totalorder %s18, 0
      %p39 = por %p37, %p38
      %p40 = scmp.ne.s32.totalorder %s26, %s27
      %p41 = scmp.eq.s32.totalorder %s19, 1
      %p42 = por %p40, %p41
      %p44 = scmp.ne.s32.totalorder %s27, %s43
      %p45 = scmp.eq.s32.totalorder %s19, 0
      %p46 = por %p44, %p45
      %s48 = sadd.s32 %s47, 1
      %p51 = scmp.eq.s32.totalorder %s13, 1
      %p52 = scmp.ne.s32.totalorder %s47, %s49
      %p53 = scmp.eq.s32.totalorder %s13, 0
      %p54 = por %p52, %p53
      %p55 = scmp.ne.s32.totalorder %s47, %s49
      %p56 = scmp.eq.s32.totalorder %s18, 1
      %p57 = por %p55, %p56
      %p58 = scmp.ne.s32.totalorder %s49, %s50
      %p59 = scmp.eq.s32.totalorder %s18, 0
      %p60 = por %p58, %p59
      %p61 = scmp.ne.s32.totalorder %s49, %s50
      %p62 = scmp.eq.s32.totalorder %s19, 1
      %p63 = por %p61, %p62
      %p65 = scmp.ne.s32.totalorder %s50, %s64
      %p66 = scmp.eq.s32.totalorder %s19, 0
      %p67 = por %p65, %p66
      %s69 = sadd.s32 %s68, 1
      %p72 = scmp.eq.s32.totalorder %s13, 1
      %p73 = scmp.ne.s32.totalorder %s68, %s70
      %p74 = scmp.eq.s32.totalorder %s13, 0
      %p75 = por %p73, %p74
      %p76 = scmp.ne.s32.totalorder %s68, %s70
      %p77 = scmp.eq.s32.totalorder %s18, 1
      %p78 = por %p76, %p77
      %p79 = scmp.ne.s32.totalorder %s70, %s71
      %p80 = scmp.eq.s32.totalorder %s18, 0
      %p81 = por %p79, %p80
      %p82 = scmp.ne.s32.totalorder %s70, %s71
      %p83 = scmp.eq.s32.totalorder %s19, 1
      %p84 = por %p82, %p83
      %p86 = scmp.ne.s32.totalorder %s71, %s85
      %p87 = scmp.eq.s32.totalorder %s19, 0
      %p88 = por %p86, %p87
      %s90 = sadd.s32 %s89, 1
      %p93 = scmp.eq.s32.totalorder %s13, 1
      %p94 = scmp.ne.s32.totalorder %s89, %s91
      %p95 = scmp.eq.s32.totalorder %s13, 0
      %p96 = por %p94, %p95
      %p97 = scmp.ne.s32.totalorder %s89, %s91
      %p98 = scmp.eq.s32.totalorder %s18, 1
      %p99 = por %p97, %p98
      %p100 = scmp.ne.s32.totalorder %s91, %s92
      %p101 = scmp.eq.s32.totalorder %s18, 0
      %p102 = por %p100, %p101
      %p103 = scmp.ne.s32.totalorder %s91, %s92
      %p104 = scmp.eq.s32.totalorder %s19, 1
      %p105 = por %p103, %p104
      %p107 = scmp.ne.s32.totalorder %s92, %s106
      %p108 = scmp.eq.s32.totalorder %s19, 0
      %p109 = por %p107, %p108
      %s111 = sadd.s32 %s110, 1
      %p114 = scmp.eq.s32.totalorder %s13, 1
      %p115 = scmp.ne.s32.totalorder %s110, %s112
      %p116 = scmp.eq.s32.totalorder %s13, 0
      %p117 = por %p115, %p116
      %p118 = scmp.ne.s32.totalorder %s110, %s112
      %p119 = scmp.eq.s32.totalorder %s18, 1
      %p120 = por %p118, %p119
      %p121 = scmp.ne.s32.totalorder %s112, %s113
      %p122 = scmp.eq.s32.totalorder %s18, 0
      %p123 = por %p121, %p122
      %p124 = scmp.ne.s32.totalorder %s112, %s113
      %p125 = scmp.eq.s32.totalorder %s19, 1
      %p126 = por %p124, %p125
      %p128 = scmp.ne.s32.totalorder %s113, %s127
      %p129 = scmp.eq.s32.totalorder %s19, 0
      %p130 = por %p128, %p129
      %s132 = sadd.s32 %s131, 1
      %p135 = scmp.eq.s32.totalorder %s13, 1
      %p136 = scmp.ne.s32.totalorder %s131, %s133
      %p137 = scmp.eq.s32.totalorder %s13, 0
      %p138 = por %p136, %p137
      %p139 = scmp.ne.s32.totalorder %s131, %s133
      %p140 = scmp.eq.s32.totalorder %s18, 1
      %p141 = por %p139, %p140
      %p142 = scmp.ne.s32.totalorder %s133, %s134
      %p143 = scmp.eq.s32.totalorder %s18, 0
      %p144 = por %p142, %p143
      %p145 = scmp.ne.s32.totalorder %s133, %s134
      %p146 = scmp.eq.s32.totalorder %s19, 1
      %p147 = por %p145, %p146
      %p149 = scmp.ne.s32.totalorder %s134, %s148
      %p150 = scmp.eq.s32.totalorder %s19, 0
      %p151 = por %p149, %p150
      %s152 = ssub.s32 %s13, %s20
      %p153 = scmp.eq.s32.totalorder %s152, 0
      %s155 = sadd.s32 %s154, 1
      %s156 = scalar_select %p153, %s154, %s155
      %p159 = pneg %p153
      %p160 = scmp.eq.s32.totalorder %s13, 1
      %p161 = por %p159, %p160
      %p162 = scmp.ne.s32.totalorder %s154, %s157
      %p163 = scmp.eq.s32.totalorder %s13, 0
      %p164 = por %p162, %p163
      %p165 = scmp.ne.s32.totalorder %s154, %s157
      %p166 = scmp.eq.s32.totalorder %s18, 1
      %p167 = por %p165, %p166
      %p168 = scmp.ne.s32.totalorder %s157, %s158
      %p169 = scmp.eq.s32.totalorder %s18, 0
      %p170 = por %p168, %p169
      %p171 = scmp.ne.s32.totalorder %s157, %s158
      %p172 = scmp.eq.s32.totalorder %s19, 1
      %p173 = por %p171, %p172
      %p175 = scmp.ne.s32.totalorder %s158, %s174
      %p176 = scmp.eq.s32.totalorder %s19, 0
      %p177 = por %p175, %p176
      %p178 = scmp.le.s32.totalorder 1, %s13
      %p179 = scmp.lt.s32.totalorder %s13, 3
      %p180 = pnand %p178, %p179
      %p181 = pneg %p180
      // Predicated region
      $region9: #{self_block_forward.1} parent=5 // pred_check
        _
      $region10: #{self_block_forward.1} parent=5 // pred_check_branch
        %183 = sbr.rel (%p180) target = $region12
      $region11: #{self_block_forward.1} parent=5 // pred_region
        %s184 = ssub.s32 %s13, 1
        // Predicated region
        $region13: #{self_block_forward.1} parent=11 // pred_check
          %p185 = pneg %p60
        $region14: #{self_block_forward.1} parent=11 // pred_check_branch
          %187 = sbr.rel (%p185) target = $region16
        $region15: #{self_block_forward.1} parent=11 // pred_region
          _
        $region16: #{self_block_forward.1} parent=11 // pred_fallthru
          _
        // Predicated region
        $region17: #{self_block_forward.1} parent=11 // pred_check
          %p188 = pneg %p81
        $region18: #{self_block_forward.1} parent=11 // pred_check_branch
          %190 = sbr.rel (%p188) target = $region20
        $region19: #{self_block_forward.1} parent=11 // pred_region
          _
        $region20: #{self_block_forward.1} parent=11 // pred_fallthru
          _
        // Predicated region
        $region21: #{self_block_forward.1} parent=11 // pred_check
          %p191 = pneg %p102
        $region22: #{self_block_forward.1} parent=11 // pred_check_branch
          %193 = sbr.rel (%p191) target = $region24
        $region23: #{self_block_forward.1} parent=11 // pred_region
          _
        $region24: #{self_block_forward.1} parent=11 // pred_fallthru
          _
        // Predicated region
        $region25: #{self_block_forward.1} parent=11 // pred_check
          %p194 = pneg %p123
        $region26: #{self_block_forward.1} parent=11 // pred_check_branch
          %196 = sbr.rel (%p194) target = $region28
        $region27: #{self_block_forward.1} parent=11 // pred_region
          _
        $region28: #{self_block_forward.1} parent=11 // pred_fallthru
          _
        // Predicated region
        $region29: #{self_block_forward.1} parent=11 // pred_check
          %p197 = pneg %p144
        $region30: #{self_block_forward.1} parent=11 // pred_check_branch
          %199 = sbr.rel (%p197) target = $region32
        $region31: #{self_block_forward.1} parent=11 // pred_region
          %s201 = ssub.s32 16, 16
          %202 = vsyncadd [#allocation6], %s201
          %s204 = sshll.u32 %s5, 4
          %s205 = int_to_ptr.vmem [resolvable:$true] %s204
          %207 = dma.vmem_to_smem %s205, 16, [#allocation5], [#allocation6]
        $region32: #{self_block_forward.1} parent=11 // pred_fallthru
          _
      $region12: #{self_block_forward.1} parent=5 // pred_fallthru
        _
      %p208 = scmp.lt.s32.totalorder %s13, 2
      // Predicated region
      $region33: #{self_block_forward.1} parent=5 // pred_check
        %p209 = pneg %p208
      $region34: #{self_block_forward.1} parent=5 // pred_check_branch
        %211 = sbr.rel (%p209) target = $region36
      $region35: #{self_block_forward.1} parent=5 // pred_region
        // Predicated region
        $region37: #{self_block_forward.1} parent=35 // pred_check
          %p212 = pneg %p33
        $region38: #{self_block_forward.1} parent=35 // pred_check_branch
          %214 = sbr.rel (%p212) target = $region40
        $region39: #{self_block_forward.1} parent=35 // pred_region
          %p215 = scmp.lt.s32.totalorder %s13, 1
          %s216 = scalar_select %p215, %s13, 1
          %s217 = smul.addr %s216, 32
          %s218 = smul.addr %s217, 4
          %s219 = scalar_lea.vmem %s0, %s218
        $region40: #{self_block_forward.1} parent=35 // pred_fallthru
          _
      $region36: #{self_block_forward.1} parent=5 // pred_fallthru
        _
      %p220 = scmp.le.s32.totalorder 1, %s13
      %p221 = scmp.lt.s32.totalorder %s13, 3
      %p222 = pnand %p220, %p221
      %p223 = pneg %p222
      // Predicated region
      $region41: #{self_block_forward.1} parent=5 // pred_check
        _
      $region42: #{self_block_forward.1} parent=5 // pred_check_branch
        %225 = sbr.rel (%p222) target = $region44
      $region43: #{self_block_forward.1} parent=5 // pred_region
        %s226 = ssub.s32 %s13, 1
        // Predicated region
        $region45: #{self_block_forward.1} parent=43 // pred_check
          %p227 = pneg %p144
        $region46: #{self_block_forward.1} parent=43 // pred_check_branch
          %229 = sbr.rel (%p227) target = $region48
        $region47: #{self_block_forward.1} parent=43 // pred_region
          %230 = dma.done [#allocation6], 16
        $region48: #{self_block_forward.1} parent=43 // pred_fallthru
          _
        %231 = sfence
        %p232 = scmp.lt.s32.totalorder %s18, 1
        %s233 = scalar_select %p232, %s18, 1
        %s234 = smul.addr %s233, 32
        %s235 = smul.addr %s234, 4
        %s236 = scalar_lea.vmem %s0, %s235
        %p237 = pneg %p39
        %p238 = pneg %p36
        %p239 = pneg %p60
        %p240 = pneg %p57
        %p241 = pneg %p81
        %p242 = pneg %p78
        %p243 = pneg %p102
        %p244 = pneg %p99
        %p245 = pneg %p123
        %p246 = pneg %p120
        %p247 = pneg %p144
        %p248 = pneg %p141
        %p249 = pneg %p170
        %p250 = pneg %p167
        %p251 = scmp.lt.s32.totalorder %s18, 1
        %s252 = scalar_select %p251, %s18, 1
        %s253 = smul.addr %s252, 2
        %s254 = scalar_lea.vmem %s6, %s253
        %p255 = scmp.lt.s32.totalorder %s18, 1
        %s256 = scalar_select %p255, %s18, 1
        %s257 = smul.addr %s256, 32
        %s258 = smul.addr %s257, 4
        %s259 = scalar_lea.vmem %s0, %s258
        %p260 = scmp.lt.s32.totalorder %s18, 1
        %s261 = scalar_select %p260, %s18, 1
        %s262 = smul.addr %s261, 2
        %s263 = scalar_lea.vmem %s6, %s262
        %v265 = vld [vmem:[%s3] sm:$0x1]
        %v266 = vld [vmem:[%s3 + $0x1] sm:$0x1]
        %v267 = vld [vmem:[%s259] sm:$0xf]
        %v268 = vld [vmem:[%s259 + $0x4] sm:$0xf]
        %v269 = vld [vmem:[%s259 + $0x8] sm:$0xf]
        %v270 = vld [vmem:[%s259 + $0xc] sm:$0xf]
        %v271 = vld [vmem:[%s259 + $0x10] sm:$0xf]
        %v272 = vld [vmem:[%s259 + $0x14] sm:$0xf]
        %v273 = vld [vmem:[%s259 + $0x18] sm:$0xf]
        %v274 = vld [vmem:[%s259 + $0x1c] sm:$0xf]
        %v275 = vld [vmem:[%s259 + $0x20] sm:$0xf]
        %v276 = vld [vmem:[%s259 + $0x24] sm:$0xf]
        %v277 = vld [vmem:[%s259 + $0x28] sm:$0xf]
        %v278 = vld [vmem:[%s259 + $0x2c] sm:$0xf]
        %v279 = vld [vmem:[%s259 + $0x30] sm:$0xf]
        %v280 = vld [vmem:[%s259 + $0x34] sm:$0xf]
        %v281 = vld [vmem:[%s259 + $0x38] sm:$0xf]
        %v282 = vld [vmem:[%s259 + $0x3c] sm:$0xf]
        %v283 = vld [vmem:[%s259 + $0x40] sm:$0xf]
        %v284 = vld [vmem:[%s259 + $0x44] sm:$0xf]
        %v285 = vld [vmem:[%s259 + $0x48] sm:$0xf]
        %v286 = vld [vmem:[%s259 + $0x4c] sm:$0xf]
        %v287 = vld [vmem:[%s259 + $0x50] sm:$0xf]
        %v288 = vld [vmem:[%s259 + $0x54] sm:$0xf]
        %v289 = vld [vmem:[%s259 + $0x58] sm:$0xf]
        %v290 = vld [vmem:[%s259 + $0x5c] sm:$0xf]
        %v291 = vld [vmem:[%s259 + $0x60] sm:$0xf]
        %v292 = vld [vmem:[%s259 + $0x64] sm:$0xf]
        %v293 = vld [vmem:[%s259 + $0x68] sm:$0xf]
        %v294 = vld [vmem:[%s259 + $0x6c] sm:$0xf]
        %v295 = vld [vmem:[%s259 + $0x70] sm:$0xf]
        %v296 = vld [vmem:[%s259 + $0x74] sm:$0xf]
        %v297 = vld [vmem:[%s259 + $0x78] sm:$0xf]
        %v298 = vld [vmem:[%s259 + $0x7c] sm:$0xf]
        %v299 = vld [vmem:[%s1] sm:$0xf]
        %v300 = vld [vmem:[%s1 + $0x4] sm:$0xf]
        %v301 = vld [vmem:[%s1 + $0x8] sm:$0xf]
        %v302 = vld [vmem:[%s1 + $0xc] sm:$0xf]
        %v303 = vld [vmem:[%s1 + $0x10] sm:$0x3]
        %v304 = vlaneseq
        %v305 = vshrl.u32 %v304, 7
        %v306 = vsub.s32 0, %v305
        %v307 = vrot.slane %v265, %v306
        %v340 = vunpack.c.l.b16 %v267
        %v341 = vunpack.c.l.b16 %v268
        %v342 = vunpack.c.l.b16 %v269
        %v343 = vunpack.c.l.b16 %v270
        %v344 = vunpack.c.l.b16 %v271
        %v345 = vunpack.c.l.b16 %v272
        %v346 = vunpack.c.l.b16 %v273
        %v347 = vunpack.c.l.b16 %v274
        %v348 = vunpack.c.l.b16 %v275
        %v349 = vunpack.c.l.b16 %v276
        %v350 = vunpack.c.l.b16 %v277
        %v351 = vunpack.c.l.b16 %v278
        %v352 = vunpack.c.l.b16 %v279
        %v353 = vunpack.c.l.b16 %v280
        %v354 = vunpack.c.l.b16 %v281
        %v355 = vunpack.c.l.b16 %v282
        %v356 = vunpack.c.l.b16 %v283
        %v357 = vunpack.c.l.b16 %v284
        %v358 = vunpack.c.l.b16 %v285
        %v359 = vunpack.c.l.b16 %v286
        %v360 = vunpack.c.l.b16 %v287
        %v361 = vunpack.c.l.b16 %v288
        %v362 = vunpack.c.l.b16 %v289
        %v363 = vunpack.c.l.b16 %v290
        %v364 = vunpack.c.l.b16 %v291
        %v365 = vunpack.c.l.b16 %v292
        %v366 = vunpack.c.l.b16 %v293
        %v367 = vunpack.c.l.b16 %v294
        %v368 = vunpack.c.l.b16 %v295
        %v369 = vunpack.c.l.b16 %v296
        %v370 = vunpack.c.l.b16 %v297
        %v371 = vunpack.c.l.b16 %v298
        %v372 = vpack.c.b16 %v341, %v340
        %v373 = vpack.c.b16 %v343, %v342
        %v374 = vpack.c.b16 %v345, %v344
        %v375 = vpack.c.b16 %v347, %v346
        %v376 = vpack.c.b16 %v349, %v348
        %v377 = vpack.c.b16 %v351, %v350
        %v378 = vpack.c.b16 %v353, %v352
        %v379 = vpack.c.b16 %v355, %v354
        %v380 = vpack.c.b16 %v357, %v356
        %v381 = vpack.c.b16 %v359, %v358
        %v382 = vpack.c.b16 %v361, %v360
        %v383 = vpack.c.b16 %v363, %v362
        %v384 = vpack.c.b16 %v365, %v364
        %v385 = vpack.c.b16 %v367, %v366
        %v386 = vpack.c.b16 %v369, %v368
        %v387 = vpack.c.b16 %v371, %v370
        %v393 = vunpack.c.l.b16 %v299
        %v394 = vunpack.c.l.b16 %v300
        %v395 = vunpack.c.l.b16 %v301
        %v396 = vunpack.c.l.b16 %v302
        %v397 = vunpack.c.l.b16 %v303
        %v398 = vpack.c.b16 %v394, %v393
        %v399 = vpack.c.b16 %v396, %v395
        %v400 = vpack.c.b16 %v397, %v397
        %vm403 = vcmask 293888
        %v405 = vsel %vm403, %v372, 0
        %v408 = vsel %vm403, %v373, 0
        %v411 = vsel %vm403, %v374, 0
        %v414 = vsel %vm403, %v375, 0
        %v417 = vsel %vm403, %v376, 0
        %v420 = vsel %vm403, %v377, 0
        %v423 = vsel %vm403, %v378, 0
        %v426 = vsel %vm403, %v379, 0
        %v429 = vsel %vm403, %v380, 0
        %v432 = vsel %vm403, %v381, 0
        %v435 = vsel %vm403, %v382, 0
        %v438 = vsel %vm403, %v383, 0
        %v441 = vsel %vm403, %v384, 0
        %v444 = vsel %vm403, %v385, 0
        %v447 = vsel %vm403, %v386, 0
        %v450 = vsel %vm403, %v387, 0
        %vm452 = vcmask 1041408
        %v454 = vsel %vm452, %v400, 0
        %456 = vmatprep.subr.bf16.mxu0 0
        %457 = vmatpush1.bf16.msra.mxu0 %v398
        %458 = vmatprep.subr.bf16.mxu0 0
        %459 = vmatpush1.bf16.msra.mxu0 %v399
        %460 = vmatprep.subr.bf16.mxu0 0
        %461 = vmatpush1.bf16.msra.mxu0 %v454
        %462 = vmatprep.subr.bf16.mxu0 0
        %463 = vmatpush1.bf16.msra.mxu0 0
        %464 = vmatprep.subr.bf16.mxu0 0
        %465 = vmatpush1.bf16.msra.mxu0 0
        %466 = vmatprep.subr.bf16.mxu0 0
        %467 = vmatpush1.bf16.msra.mxu0 0
        %468 = vmatprep.subr.bf16.mxu0 0
        %469 = vmatpush1.bf16.msra.mxu0 0
        %470 = vmatprep.subr.bf16.mxu0 0
        %471 = vmatpush1.bf16.msra.mxu0 0
        %472 = vmatprep.subr.bf16.mxu0 0
        %473 = vmatpush1.bf16.msra.mxu0 0
        %474 = vmatprep.subr.bf16.mxu0 0
        %475 = vmatpush1.bf16.msra.mxu0 0
        %476 = vmatprep.subr.bf16.mxu0 0
        %477 = vmatpush1.bf16.msra.mxu0 0
        %478 = vmatprep.subr.bf16.mxu0 0
        %479 = vmatpush1.bf16.msra.mxu0 0
        %480 = vmatprep.subr.bf16.mxu0 0
        %481 = vmatpush1.bf16.msra.mxu0 0
        %482 = vmatprep.subr.bf16.mxu0 0
        %483 = vmatpush1.bf16.msra.mxu0 0
        %484 = vmatprep.subr.bf16.mxu0 0
        %485 = vmatpush1.bf16.msra.mxu0 0
        %486 = vmatprep.subr.bf16.mxu0 0
        %487 = vmatpush1.bf16.msra.mxu0 0
        %488 = vmatprep.mubr.bf16.mxu0 0
        %489 = vmatmul.mubr.bf16.gmra.mrb[0].mxu0 %v405
        %v490 = vpop.f32.mrb[0].mxu0
        %v491 = vadd.f32 %v307, %v490
        %v492 = vpop.f32.mrb[0].mxu0
        %v493 = vpop.f32.mrb[0].mxu0
        %v494 = vadd.f32 %v307, %v493
        %v495 = vpop.f32.mrb[0].mxu0
        %496 = vmatprep.mubr.bf16.mxu0 0
        %497 = vmatmul.mubr.bf16.gmra.mrb[0].mxu0 %v408
        %v498 = vpop.f32.mrb[0].mxu0
        %v499 = vadd.f32 %v307, %v498
        %v500 = vpop.f32.mrb[0].mxu0
        %v501 = vpop.f32.mrb[0].mxu0
        %v502 = vadd.f32 %v307, %v501
        %v503 = vpop.f32.mrb[0].mxu0
        %504 = vmatprep.mubr.bf16.mxu0 0
        %505 = vmatmul.mubr.bf16.gmra.mrb[0].mxu0 %v411
        %v506 = vpop.f32.mrb[0].mxu0
        %v507 = vadd.f32 %v307, %v506
        %v508 = vpop.f32.mrb[0].mxu0
        %v509 = vpop.f32.mrb[0].mxu0
        %v510 = vadd.f32 %v307, %v509
        %v511 = vpop.f32.mrb[0].mxu0
        %512 = vmatprep.mubr.bf16.mxu0 0
        %513 = vmatmul.mubr.bf16.gmra.mrb[0].mxu0 %v414
        %v514 = vpop.f32.mrb[0].mxu0
        %v515 = vadd.f32 %v307, %v514
        %v516 = vpop.f32.mrb[0].mxu0
        %v517 = vpop.f32.mrb[0].mxu0
        %v518 = vadd.f32 %v307, %v517
        %v519 = vpop.f32.mrb[0].mxu0
        %520 = vmatprep.mubr.bf16.mxu0 0
        %521 = vmatmul.mubr.bf16.gmra.mrb[0].mxu0 %v417
        %v522 = vpop.f32.mrb[0].mxu0
        %v523 = vadd.f32 %v307, %v522
        %v524 = vpop.f32.mrb[0].mxu0
        %v525 = vpop.f32.mrb[0].mxu0
        %v526 = vadd.f32 %v307, %v525
        %v527 = vpop.f32.mrb[0].mxu0
        %528 = vmatprep.mubr.bf16.mxu0 0
        %529 = vmatmul.mubr.bf16.gmra.mrb[0].mxu0 %v420
        %v530 = vpop.f32.mrb[0].mxu0
        %v531 = vadd.f32 %v307, %v530
        %v532 = vpop.f32.mrb[0].mxu0
        %v533 = vpop.f32.mrb[0].mxu0
        %v534 = vadd.f32 %v307, %v533
        %v535 = vpop.f32.mrb[0].mxu0
        %536 = vmatprep.mubr.bf16.mxu0 0
        %537 = vmatmul.mubr.bf16.gmra.mrb[0].mxu0 %v423
        %v538 = vpop.f32.mrb[0].mxu0
        %v539 = vadd.f32 %v307, %v538
        %v540 = vpop.f32.mrb[0].mxu0
        %v541 = vpop.f32.mrb[0].mxu0
        %v542 = vadd.f32 %v307, %v541
        %v543 = vpop.f32.mrb[0].mxu0
        %544 = vmatprep.mubr.bf16.mxu0 0
        %545 = vmatmul.mubr.bf16.gmra.mrb[0].mxu0 %v426
        %v546 = vpop.f32.mrb[0].mxu0
        %v547 = vadd.f32 %v307, %v546
        %v548 = vpop.f32.mrb[0].mxu0
        %v549 = vpop.f32.mrb[0].mxu0
        %v550 = vadd.f32 %v307, %v549
        %v551 = vpop.f32.mrb[0].mxu0
        %552 = vmatprep.mubr.bf16.mxu0 0
        %553 = vmatmul.mubr.bf16.gmra.mrb[0].mxu0 %v429
        %v554 = vpop.f32.mrb[0].mxu0
        %v555 = vadd.f32 %v307, %v554
        %v556 = vpop.f32.mrb[0].mxu0
        %v557 = vpop.f32.mrb[0].mxu0
        %v558 = vadd.f32 %v307, %v557
        %v559 = vpop.f32.mrb[0].mxu0
        %560 = vmatprep.mubr.bf16.mxu0 0
        %561 = vmatmul.mubr.bf16.gmra.mrb[0].mxu0 %v432
        %v562 = vpop.f32.mrb[0].mxu0
        %v563 = vadd.f32 %v307, %v562
        %v564 = vpop.f32.mrb[0].mxu0
        %v565 = vpop.f32.mrb[0].mxu0
        %v566 = vadd.f32 %v307, %v565
        %v567 = vpop.f32.mrb[0].mxu0
        %568 = vmatprep.mubr.bf16.mxu0 0
        %569 = vmatmul.mubr.bf16.gmra.mrb[0].mxu0 %v435
        %v570 = vpop.f32.mrb[0].mxu0
        %v571 = vadd.f32 %v307, %v570
        %v572 = vpop.f32.mrb[0].mxu0
        %v573 = vpop.f32.mrb[0].mxu0
        %v574 = vadd.f32 %v307, %v573
        %v575 = vpop.f32.mrb[0].mxu0
        %576 = vmatprep.mubr.bf16.mxu0 0
        %577 = vmatmul.mubr.bf16.gmra.mrb[0].mxu0 %v438
        %v578 = vpop.f32.mrb[0].mxu0
        %v579 = vadd.f32 %v307, %v578
        %v580 = vpop.f32.mrb[0].mxu0
        %v581 = vpop.f32.mrb[0].mxu0
        %v582 = vadd.f32 %v307, %v581
        %v583 = vpop.f32.mrb[0].mxu0
        %584 = vmatprep.mubr.bf16.mxu0 0
        %585 = vmatmul.mubr.bf16.gmra.mrb[0].mxu0 %v441
        %v586 = vpop.f32.mrb[0].mxu0
        %v587 = vadd.f32 %v307, %v586
        %v588 = vpop.f32.mrb[0].mxu0
        %v589 = vpop.f32.mrb[0].mxu0
        %v590 = vadd.f32 %v307, %v589
        %v591 = vpop.f32.mrb[0].mxu0
        %592 = vmatprep.mubr.bf16.mxu0 0
        %593 = vmatmul.mubr.bf16.gmra.mrb[0].mxu0 %v444
        %v594 = vpop.f32.mrb[0].mxu0
        %v595 = vadd.f32 %v307, %v594
        %v596 = vpop.f32.mrb[0].mxu0
        %v597 = vpop.f32.mrb[0].mxu0
        %v598 = vadd.f32 %v307, %v597
        %v599 = vpop.f32.mrb[0].mxu0
        %600 = vmatprep.mubr.bf16.mxu0 0
        %601 = vmatmul.mubr.bf16.gmra.mrb[0].mxu0 %v447
        %v602 = vpop.f32.mrb[0].mxu0
        %v603 = vadd.f32 %v307, %v602
        %v604 = vpop.f32.mrb[0].mxu0
        %v605 = vpop.f32.mrb[0].mxu0
        %v606 = vadd.f32 %v307, %v605
        %v607 = vpop.f32.mrb[0].mxu0
        %608 = vmatprep.mubr.bf16.mxu0 0
        %609 = vmatmul.mubr.bf16.gmra.mrb[0].mxu0 %v450
        %v610 = vpop.f32.mrb[0].mxu0
        %v611 = vadd.f32 %v307, %v610
        %v612 = vpop.f32.mrb[0].mxu0
        %v613 = vpop.f32.mrb[0].mxu0
        %v614 = vadd.f32 %v307, %v613
        %v615 = vpop.f32.mrb[0].mxu0
        %616 = vdwg.mxu0
        %v617 = vld [vmem:[%s4] sm:$0x1]
        %vm618 = vcmask 261120
        %v620 = vsel %vm618, %v617, 0
        %v623 = vsel %vm618, %v491, 0
        %v626 = vsel %vm618, %v494, 0
        %v629 = vsel %vm618, %v499, 0
        %v632 = vsel %vm618, %v502, 0
        %v635 = vsel %vm618, %v507, 0
        %v638 = vsel %vm618, %v510, 0
        %v641 = vsel %vm618, %v515, 0
        %v644 = vsel %vm618, %v518, 0
        %v647 = vsel %vm618, %v523, 0
        %v650 = vsel %vm618, %v526, 0
        %v653 = vsel %vm618, %v531, 0
        %v656 = vsel %vm618, %v534, 0
        %v659 = vsel %vm618, %v539, 0
        %v662 = vsel %vm618, %v542, 0
        %v665 = vsel %vm618, %v547, 0
        %v668 = vsel %vm618, %v550, 0
        %v671 = vsel %vm618, %v555, 0
        %v674 = vsel %vm618, %v558, 0
        %v677 = vsel %vm618, %v563, 0
        %v680 = vsel %vm618, %v566, 0
        %v683 = vsel %vm618, %v571, 0
        %v686 = vsel %vm618, %v574, 0
        %v689 = vsel %vm618, %v579, 0
        %v692 = vsel %vm618, %v582, 0
        %v695 = vsel %vm618, %v587, 0
        %v698 = vsel %vm618, %v590, 0
        %v701 = vsel %vm618, %v595, 0
        %v704 = vsel %vm618, %v598, 0
        %v707 = vsel %vm618, %v603, 0
        %v710 = vsel %vm618, %v606, 0
        %v713 = vsel %vm618, %v611, 0
        %v716 = vsel %vm618, %v614, 0
        %718 = vmatprep.subr.mxu0 0.0
        %719 = vmatpush1.xpose.msra.mxu0 %v623
        %720 = vmatprep.subr.mxu0 0.0
        %721 = vmatpush1.xpose.msra.mxu0 %v626
        %722 = vmatprep.subr.mxu0 0.0
        %723 = vmatpush1.xpose.msra.mxu0 %v629
        %724 = vmatprep.subr.mxu0 0.0
        %725 = vmatpush1.xpose.msra.mxu0 %v632
        %726 = vmatprep.subr.mxu0 0.0
        %727 = vmatpush1.xpose.msra.mxu0 %v635
        %728 = vmatprep.subr.mxu0 0.0
        %729 = vmatpush1.xpose.msra.mxu0 %v638
        %730 = vmatprep.subr.mxu0 0.0
        %731 = vmatpush1.xpose.msra.mxu0 %v641
        %732 = vmatprep.subr.mxu0 0.0
        %733 = vmatpush1.xpose.msra.mxu0 %v644
        %734 = vmatprep.subr.mxu0 0.0
        %735 = vmatpush1.xpose.msra.mxu0 %v647
        %736 = vmatprep.subr.mxu0 0.0
        %737 = vmatpush1.xpose.msra.mxu0 %v650
        %738 = vmatprep.subr.mxu0 0.0
        %739 = vmatpush1.xpose.msra.mxu0 %v653
        %740 = vmatprep.subr.mxu0 0.0
        %741 = vmatpush1.xpose.msra.mxu0 %v656
        %742 = vmatprep.subr.mxu0 0.0
        %743 = vmatpush1.xpose.msra.mxu0 %v659
        %744 = vmatprep.subr.mxu0 0.0
        %745 = vmatpush1.xpose.msra.mxu0 %v662
        %746 = vmatprep.subr.mxu0 0.0
        %747 = vmatpush1.xpose.msra.mxu0 %v665
        %748 = vmatprep.subr.mxu0 0.0
        %749 = vmatpush1.xpose.msra.mxu0 %v668
        %750 = vmatprep.subr.mxu0 0.0
        %751 = vmatpush1.xpose.msra.mxu0 %v671
        %752 = vmatprep.subr.mxu0 0.0
        %753 = vmatpush1.xpose.msra.mxu0 %v674
        %754 = vmatprep.subr.mxu0 0.0
        %755 = vmatpush1.xpose.msra.mxu0 %v677
        %756 = vmatprep.subr.mxu0 0.0
        %757 = vmatpush1.xpose.msra.mxu0 %v680
        %758 = vmatprep.subr.mxu0 0.0
        %759 = vmatpush1.xpose.msra.mxu0 %v683
        %760 = vmatprep.subr.mxu0 0.0
        %761 = vmatpush1.xpose.msra.mxu0 %v686
        %762 = vmatprep.subr.mxu0 0.0
        %763 = vmatpush1.xpose.msra.mxu0 %v689
        %764 = vmatprep.subr.mxu0 0.0
        %765 = vmatpush1.xpose.msra.mxu0 %v692
        %766 = vmatprep.subr.mxu0 0.0
        %767 = vmatpush1.xpose.msra.mxu0 %v695
        %768 = vmatprep.subr.mxu0 0.0
        %769 = vmatpush1.xpose.msra.mxu0 %v698
        %770 = vmatprep.subr.mxu0 0.0
        %771 = vmatpush1.xpose.msra.mxu0 %v701
        %772 = vmatprep.subr.mxu0 0.0
        %773 = vmatpush1.xpose.msra.mxu0 %v704
        %774 = vmatprep.subr.mxu0 0.0
        %775 = vmatpush1.xpose.msra.mxu0 %v707
        %776 = vmatprep.subr.mxu0 0.0
        %777 = vmatpush1.xpose.msra.mxu0 %v710
        %778 = vmatprep.subr.mxu0 0.0
        %779 = vmatpush1.xpose.msra.mxu0 %v713
        %780 = vmatprep.subr.mxu0 0.0
        %781 = vmatpush1.xpose.msra.mxu0 %v716
        %782 = vmatprep.mubr.f32.mxu0 0.0
        %783 = vmatmul.mubr.f32.gmra.mrb[0].mxu0 %v620
        %v784 = vpop.f32.mrb[0].mxu0
        %v785 = vadd.f32 0.0, %v784
        %v786 = vpop.f32.mrb[0].mxu0
        %v787 = vadd.f32 0.0, %v786
        %788 = vdwg.mxu0
        %v789 = vpack.c.bf16 %v494, %v491
        %v790 = vpack.c.bf16 %v502, %v499
        %v791 = vpack.c.bf16 %v510, %v507
        %v792 = vpack.c.bf16 %v518, %v515
        %v793 = vpack.c.bf16 %v526, %v523
        %v794 = vpack.c.bf16 %v534, %v531
        %v795 = vpack.c.bf16 %v542, %v539
        %v796 = vpack.c.bf16 %v550, %v547
        %v797 = vpack.c.bf16 %v558, %v555
        %v798 = vpack.c.bf16 %v566, %v563
        %v799 = vpack.c.bf16 %v574, %v571
        %v800 = vpack.c.bf16 %v582, %v579
        %v801 = vpack.c.bf16 %v590, %v587
        %v802 = vpack.c.bf16 %v598, %v595
        %v803 = vpack.c.bf16 %v606, %v603
        %v804 = vpack.c.bf16 %v614, %v611
        %v805 = vld [vmem:[%s2] sm:$0xf]
        %v806 = vld [vmem:[%s2 + $0x4] sm:$0xf]
        %v807 = vld [vmem:[%s2 + $0x8] sm:$0xf]
        %v808 = vld [vmem:[%s2 + $0xc] sm:$0xf]
        %v809 = vlaneseq
        %v810 = vshrl.u32 %v809, 7
        %v811 = vsub.s32 0, %v810
        %v812 = vrot.slane %v266, %v811
        %v817 = vunpack.c.l.b16 %v805
        %v818 = vunpack.c.l.b16 %v806
        %v819 = vunpack.c.l.b16 %v807
        %v820 = vunpack.c.l.b16 %v808
        %v821 = vpack.c.b16 %v818, %v817
        %v822 = vpack.c.b16 %v820, %v819
        %v826 = vsel %vm618, %v789, 0
        %v829 = vsel %vm618, %v790, 0
        %v832 = vsel %vm618, %v791, 0
        %v835 = vsel %vm618, %v792, 0
        %v838 = vsel %vm618, %v793, 0
        %v841 = vsel %vm618, %v794, 0
        %v844 = vsel %vm618, %v795, 0
        %v847 = vsel %vm618, %v796, 0
        %v850 = vsel %vm618, %v797, 0
        %v853 = vsel %vm618, %v798, 0
        %v856 = vsel %vm618, %v799, 0
        %v859 = vsel %vm618, %v800, 0
        %v862 = vsel %vm618, %v801, 0
        %v865 = vsel %vm618, %v802, 0
        %v868 = vsel %vm618, %v803, 0
        %v871 = vsel %vm618, %v804, 0
        %873 = vmatprep.subr.bf16.mxu0 0
        %874 = vmatpush1.bf16.msra.mxu0 %v821
        %875 = vmatprep.subr.bf16.mxu0 0
        %876 = vmatpush1.bf16.msra.mxu0 %v822
        %877 = vmatprep.subr.bf16.mxu0 0
        %878 = vmatpush1.bf16.msra.mxu0 0
        %879 = vmatprep.subr.bf16.mxu0 0
        %880 = vmatpush1.bf16.msra.mxu0 0
        %881 = vmatprep.subr.bf16.mxu0 0
        %882 = vmatpush1.bf16.msra.mxu0 0
        %883 = vmatprep.subr.bf16.mxu0 0
        %884 = vmatpush1.bf16.msra.mxu0 0
        %885 = vmatprep.subr.bf16.mxu0 0
        %886 = vmatpush1.bf16.msra.mxu0 0
        %887 = vmatprep.subr.bf16.mxu0 0
        %888 = vmatpush1.bf16.msra.mxu0 0
        %889 = vmatprep.subr.bf16.mxu0 0
        %890 = vmatpush1.bf16.msra.mxu0 0
        %891 = vmatprep.subr.bf16.mxu0 0
        %892 = vmatpush1.bf16.msra.mxu0 0
        %893 = vmatprep.subr.bf16.mxu0 0
        %894 = vmatpush1.bf16.msra.mxu0 0
        %895 = vmatprep.subr.bf16.mxu0 0
        %896 = vmatpush1.bf16.msra.mxu0 0
        %897 = vmatprep.subr.bf16.mxu0 0
        %898 = vmatpush1.bf16.msra.mxu0 0
        %899 = vmatprep.subr.bf16.mxu0 0
        %900 = vmatpush1.bf16.msra.mxu0 0
        %901 = vmatprep.subr.bf16.mxu0 0
        %902 = vmatpush1.bf16.msra.mxu0 0
        %903 = vmatprep.subr.bf16.mxu0 0
        %904 = vmatpush1.bf16.msra.mxu0 0
        %905 = vmatprep.mubr.bf16.mxu0 0
        %906 = vmatmul.mubr.bf16.gmra.mrb[0].mxu0 %v826
        %v907 = vpop.f32.mrb[0].mxu0
        %v908 = vadd.f32 %v812, %v907
        %v909 = vpop.f32.mrb[0].mxu0
        %v910 = vpop.f32.mrb[0].mxu0
        %v911 = vadd.f32 %v812, %v910
        %v912 = vpop.f32.mrb[0].mxu0
        %913 = vmatprep.mubr.bf16.mxu0 0
        %914 = vmatmul.mubr.bf16.gmra.mrb[0].mxu0 %v829
        %v915 = vpop.f32.mrb[0].mxu0
        %v916 = vadd.f32 %v812, %v915
        %v917 = vpop.f32.mrb[0].mxu0
        %v918 = vpop.f32.mrb[0].mxu0
        %v919 = vadd.f32 %v812, %v918
        %v920 = vpop.f32.mrb[0].mxu0
        %921 = vmatprep.mubr.bf16.mxu0 0
        %922 = vmatmul.mubr.bf16.gmra.mrb[0].mxu0 %v832
        %v923 = vpop.f32.mrb[0].mxu0
        %v924 = vadd.f32 %v812, %v923
        %v925 = vpop.f32.mrb[0].mxu0
        %v926 = vpop.f32.mrb[0].mxu0
        %v927 = vadd.f32 %v812, %v926
        %v928 = vpop.f32.mrb[0].mxu0
        %929 = vmatprep.mubr.bf16.mxu0 0
        %930 = vmatmul.mubr.bf16.gmra.mrb[0].mxu0 %v835
        %v931 = vpop.f32.mrb[0].mxu0
        %v932 = vadd.f32 %v812, %v931
        %v933 = vpop.f32.mrb[0].mxu0
        %v934 = vpop.f32.mrb[0].mxu0
        %v935 = vadd.f32 %v812, %v934
        %v936 = vpop.f32.mrb[0].mxu0
        %937 = vmatprep.mubr.bf16.mxu0 0
        %938 = vmatmul.mubr.bf16.gmra.mrb[0].mxu0 %v838
        %v939 = vpop.f32.mrb[0].mxu0
        %v940 = vadd.f32 %v812, %v939
        %v941 = vpop.f32.mrb[0].mxu0
        %v942 = vpop.f32.mrb[0].mxu0
        %v943 = vadd.f32 %v812, %v942
        %v944 = vpop.f32.mrb[0].mxu0
        %945 = vmatprep.mubr.bf16.mxu0 0
        %946 = vmatmul.mubr.bf16.gmra.mrb[0].mxu0 %v841
        %v947 = vpop.f32.mrb[0].mxu0
        %v948 = vadd.f32 %v812, %v947
        %v949 = vpop.f32.mrb[0].mxu0
        %v950 = vpop.f32.mrb[0].mxu0
        %v951 = vadd.f32 %v812, %v950
        %v952 = vpop.f32.mrb[0].mxu0
        %953 = vmatprep.mubr.bf16.mxu0 0
        %954 = vmatmul.mubr.bf16.gmra.mrb[0].mxu0 %v844
        %v955 = vpop.f32.mrb[0].mxu0
        %v956 = vadd.f32 %v812, %v955
        %v957 = vpop.f32.mrb[0].mxu0
        %v958 = vpop.f32.mrb[0].mxu0
        %v959 = vadd.f32 %v812, %v958
        %v960 = vpop.f32.mrb[0].mxu0
        %961 = vmatprep.mubr.bf16.mxu0 0
        %962 = vmatmul.mubr.bf16.gmra.mrb[0].mxu0 %v847
        %v963 = vpop.f32.mrb[0].mxu0
        %v964 = vadd.f32 %v812, %v963
        %v965 = vpop.f32.mrb[0].mxu0
        %v966 = vpop.f32.mrb[0].mxu0
        %v967 = vadd.f32 %v812, %v966
        %v968 = vpop.f32.mrb[0].mxu0
        %969 = vmatprep.mubr.bf16.mxu0 0
        %970 = vmatmul.mubr.bf16.gmra.mrb[0].mxu0 %v850
        %v971 = vpop.f32.mrb[0].mxu0
        %v972 = vadd.f32 %v812, %v971
        %v973 = vpop.f32.mrb[0].mxu0
        %v974 = vpop.f32.mrb[0].mxu0
        %v975 = vadd.f32 %v812, %v974
        %v976 = vpop.f32.mrb[0].mxu0
        %977 = vmatprep.mubr.bf16.mxu0 0
        %978 = vmatmul.mubr.bf16.gmra.mrb[0].mxu0 %v853
        %v979 = vpop.f32.mrb[0].mxu0
        %v980 = vadd.f32 %v812, %v979
        %v981 = vpop.f32.mrb[0].mxu0
        %v982 = vpop.f32.mrb[0].mxu0
        %v983 = vadd.f32 %v812, %v982
        %v984 = vpop.f32.mrb[0].mxu0
        %985 = vmatprep.mubr.bf16.mxu0 0
        %986 = vmatmul.mubr.bf16.gmra.mrb[0].mxu0 %v856
        %v987 = vpop.f32.mrb[0].mxu0
        %v988 = vadd.f32 %v812, %v987
        %v989 = vpop.f32.mrb[0].mxu0
        %v990 = vpop.f32.mrb[0].mxu0
        %v991 = vadd.f32 %v812, %v990
        %v992 = vpop.f32.mrb[0].mxu0
        %993 = vmatprep.mubr.bf16.mxu0 0
        %994 = vmatmul.mubr.bf16.gmra.mrb[0].mxu0 %v859
        %v995 = vpop.f32.mrb[0].mxu0
        %v996 = vadd.f32 %v812, %v995
        %v997 = vpop.f32.mrb[0].mxu0
        %v998 = vpop.f32.mrb[0].mxu0
        %v999 = vadd.f32 %v812, %v998
        %v1000 = vpop.f32.mrb[0].mxu0
        %1001 = vmatprep.mubr.bf16.mxu0 0
        %1002 = vmatmul.mubr.bf16.gmra.mrb[0].mxu0 %v862
        %v1003 = vpop.f32.mrb[0].mxu0
        %v1004 = vadd.f32 %v812, %v1003
        %v1005 = vpop.f32.mrb[0].mxu0
        %v1006 = vpop.f32.mrb[0].mxu0
        %v1007 = vadd.f32 %v812, %v1006
        %v1008 = vpop.f32.mrb[0].mxu0
        %1009 = vmatprep.mubr.bf16.mxu0 0
        %1010 = vmatmul.mubr.bf16.gmra.mrb[0].mxu0 %v865
        %v1011 = vpop.f32.mrb[0].mxu0
        %v1012 = vadd.f32 %v812, %v1011
        %v1013 = vpop.f32.mrb[0].mxu0
        %v1014 = vpop.f32.mrb[0].mxu0
        %v1015 = vadd.f32 %v812, %v1014
        %v1016 = vpop.f32.mrb[0].mxu0
        %1017 = vmatprep.mubr.bf16.mxu0 0
        %1018 = vmatmul.mubr.bf16.gmra.mrb[0].mxu0 %v868
        %v1019 = vpop.f32.mrb[0].mxu0
        %v1020 = vadd.f32 %v812, %v1019
        %v1021 = vpop.f32.mrb[0].mxu0
        %v1022 = vpop.f32.mrb[0].mxu0
        %v1023 = vadd.f32 %v812, %v1022
        %v1024 = vpop.f32.mrb[0].mxu0
        %1025 = vmatprep.mubr.bf16.mxu0 0
        %1026 = vmatmul.mubr.bf16.gmra.mrb[0].mxu0 %v871
        %v1027 = vpop.f32.mrb[0].mxu0
        %v1028 = vadd.f32 %v812, %v1027
        %v1029 = vpop.f32.mrb[0].mxu0
        %v1030 = vpop.f32.mrb[0].mxu0
        %v1031 = vadd.f32 %v812, %v1030
        %v1032 = vpop.f32.mrb[0].mxu0
        %1033 = vdwg.mxu0
        %v1034 = vpack.c.bf16 %v911, %v908
        %v1035 = vpack.c.bf16 %v919, %v916
        %v1036 = vpack.c.bf16 %v927, %v924
        %v1037 = vpack.c.bf16 %v935, %v932
        %v1038 = vpack.c.bf16 %v943, %v940
        %v1039 = vpack.c.bf16 %v951, %v948
        %v1040 = vpack.c.bf16 %v959, %v956
        %v1041 = vpack.c.bf16 %v967, %v964
        %v1042 = vpack.c.bf16 %v975, %v972
        %v1043 = vpack.c.bf16 %v983, %v980
        %v1044 = vpack.c.bf16 %v991, %v988
        %v1045 = vpack.c.bf16 %v999, %v996
        %v1046 = vpack.c.bf16 %v1007, %v1004
        %v1047 = vpack.c.bf16 %v1015, %v1012
        %v1048 = vpack.c.bf16 %v1023, %v1020
        %v1049 = vpack.c.bf16 %v1031, %v1028
        %vm1050 = vcmask 31744
        %1051 = vst.msk [vmem:[#allocation2] sm:$0xff] %vm1050, %v1034
        %1052 = vst.msk [vmem:[#allocation2 + $0x8] sm:$0xff] %vm1050, %v1035
        %1053 = vst.msk [vmem:[#allocation2 + $0x10] sm:$0xff] %vm1050, %v1036
        %1054 = vst.msk [vmem:[#allocation2 + $0x18] sm:$0xff] %vm1050, %v1037
        %1055 = vst.msk [vmem:[#allocation2 + $0x20] sm:$0xff] %vm1050, %v1038
        %1056 = vst.msk [vmem:[#allocation2 + $0x28] sm:$0xff] %vm1050, %v1039
        %1057 = vst.msk [vmem:[#allocation2 + $0x30] sm:$0xff] %vm1050, %v1040
        %1058 = vst.msk [vmem:[#allocation2 + $0x38] sm:$0xff] %vm1050, %v1041
        %1059 = vst.msk [vmem:[#allocation2 + $0x40] sm:$0xff] %vm1050, %v1042
        %1060 = vst.msk [vmem:[#allocation2 + $0x48] sm:$0xff] %vm1050, %v1043
        %1061 = vst.msk [vmem:[#allocation2 + $0x50] sm:$0xff] %vm1050, %v1044
        %1062 = vst.msk [vmem:[#allocation2 + $0x58] sm:$0xff] %vm1050, %v1045
        %1063 = vst.msk [vmem:[#allocation2 + $0x60] sm:$0xff] %vm1050, %v1046
        %1064 = vst.msk [vmem:[#allocation2 + $0x68] sm:$0xff] %vm1050, %v1047
        %1065 = vst.msk [vmem:[#allocation2 + $0x70] sm:$0xff] %vm1050, %v1048
        %1066 = vst.msk [vmem:[#allocation2 + $0x78] sm:$0xff] %vm1050, %v1049
        %1099 = vrot.lane.b32.xlu0 %v908, 120
        %v1100 = vpop.permute.xlu0 %1099
        %1101 = vrot.lane.b32.xlu0 %v911, 120
        %v1102 = vpop.permute.xlu0 %1101
        %1103 = vrot.lane.b32.xlu0 %v916, 120
        %v1104 = vpop.permute.xlu0 %1103
        %1105 = vrot.lane.b32.xlu0 %v919, 120
        %v1106 = vpop.permute.xlu0 %1105
        %1107 = vrot.lane.b32.xlu0 %v924, 120
        %v1108 = vpop.permute.xlu0 %1107
        %1109 = vrot.lane.b32.xlu0 %v927, 120
        %v1110 = vpop.permute.xlu0 %1109
        %1111 = vrot.lane.b32.xlu0 %v932, 120
        %v1112 = vpop.permute.xlu0 %1111
        %1113 = vrot.lane.b32.xlu0 %v935, 120
        %v1114 = vpop.permute.xlu0 %1113
        %1115 = vrot.lane.b32.xlu0 %v940, 120
        %v1116 = vpop.permute.xlu0 %1115
        %1117 = vrot.lane.b32.xlu0 %v943, 120
        %v1118 = vpop.permute.xlu0 %1117
        %1119 = vrot.lane.b32.xlu0 %v948, 120
        %v1120 = vpop.permute.xlu0 %1119
        %1121 = vrot.lane.b32.xlu0 %v951, 120
        %v1122 = vpop.permute.xlu0 %1121
        %1123 = vrot.lane.b32.xlu0 %v956, 120
        %v1124 = vpop.permute.xlu0 %1123
        %1125 = vrot.lane.b32.xlu0 %v959, 120
        %v1126 = vpop.permute.xlu0 %1125
        %1127 = vrot.lane.b32.xlu0 %v964, 120
        %v1128 = vpop.permute.xlu0 %1127
        %1129 = vrot.lane.b32.xlu0 %v967, 120
        %v1130 = vpop.permute.xlu0 %1129
        %1131 = vrot.lane.b32.xlu0 %v972, 120
        %v1132 = vpop.permute.xlu0 %1131
        %1133 = vrot.lane.b32.xlu0 %v975, 120
        %v1134 = vpop.permute.xlu0 %1133
        %1135 = vrot.lane.b32.xlu0 %v980, 120
        %v1136 = vpop.permute.xlu0 %1135
        %1137 = vrot.lane.b32.xlu0 %v983, 120
        %v1138 = vpop.permute.xlu0 %1137
        %1139 = vrot.lane.b32.xlu0 %v988, 120
        %v1140 = vpop.permute.xlu0 %1139
        %1141 = vrot.lane.b32.xlu0 %v991, 120
        %v1142 = vpop.permute.xlu0 %1141
        %1143 = vrot.lane.b32.xlu0 %v996, 120
        %v1144 = vpop.permute.xlu0 %1143
        %1145 = vrot.lane.b32.xlu0 %v999, 120
        %v1146 = vpop.permute.xlu0 %1145
        %1147 = vrot.lane.b32.xlu0 %v1004, 120
        %v1148 = vpop.permute.xlu0 %1147
        %1149 = vrot.lane.b32.xlu0 %v1007, 120
        %v1150 = vpop.permute.xlu0 %1149
        %1151 = vrot.lane.b32.xlu0 %v1012, 120
        %v1152 = vpop.permute.xlu0 %1151
        %1153 = vrot.lane.b32.xlu0 %v1015, 120
        %v1154 = vpop.permute.xlu0 %1153
        %1155 = vrot.lane.b32.xlu0 %v1020, 120
        %v1156 = vpop.permute.xlu0 %1155
        %1157 = vrot.lane.b32.xlu0 %v1023, 120
        %v1158 = vpop.permute.xlu0 %1157
        %1159 = vrot.lane.b32.xlu0 %v1028, 120
        %v1160 = vpop.permute.xlu0 %1159
        %1161 = vrot.lane.b32.xlu0 %v1031, 120
        %v1162 = vpop.permute.xlu0 %1161
        %vm1195 = vcmask 7168
        %1196 = vst.msk [vmem:[#allocation3] sm:$0xff] %vm1195, %v1100
        %1197 = vst.msk [vmem:[#allocation3 + $0x8] sm:$0xff] %vm1195, %v1102
        %1198 = vst.msk [vmem:[#allocation3 + $0x10] sm:$0xff] %vm1195, %v1104
        %1199 = vst.msk [vmem:[#allocation3 + $0x18] sm:$0xff] %vm1195, %v1106
        %1200 = vst.msk [vmem:[#allocation3 + $0x20] sm:$0xff] %vm1195, %v1108
        %1201 = vst.msk [vmem:[#allocation3 + $0x28] sm:$0xff] %vm1195, %v1110
        %1202 = vst.msk [vmem:[#allocation3 + $0x30] sm:$0xff] %vm1195, %v1112
        %1203 = vst.msk [vmem:[#allocation3 + $0x38] sm:$0xff] %vm1195, %v1114
        %1204 = vst.msk [vmem:[#allocation3 + $0x40] sm:$0xff] %vm1195, %v1116
        %1205 = vst.msk [vmem:[#allocation3 + $0x48] sm:$0xff] %vm1195, %v1118
        %1206 = vst.msk [vmem:[#allocation3 + $0x50] sm:$0xff] %vm1195, %v1120
        %1207 = vst.msk [vmem:[#allocation3 + $0x58] sm:$0xff] %vm1195, %v1122
        %1208 = vst.msk [vmem:[#allocation3 + $0x60] sm:$0xff] %vm1195, %v1124
        %1209 = vst.msk [vmem:[#allocation3 + $0x68] sm:$0xff] %vm1195, %v1126
        %1210 = vst.msk [vmem:[#allocation3 + $0x70] sm:$0xff] %vm1195, %v1128
        %1211 = vst.msk [vmem:[#allocation3 + $0x78] sm:$0xff] %vm1195, %v1130
        %1212 = vst.msk [vmem:[#allocation3 + $0x80] sm:$0xff] %vm1195, %v1132
        %1213 = vst.msk [vmem:[#allocation3 + $0x88] sm:$0xff] %vm1195, %v1134
        %1214 = vst.msk [vmem:[#allocation3 + $0x90] sm:$0xff] %vm1195, %v1136
        %1215 = vst.msk [vmem:[#allocation3 + $0x98] sm:$0xff] %vm1195, %v1138
        %1216 = vst.msk [vmem:[#allocation3 + $0xa0] sm:$0xff] %vm1195, %v1140
        %1217 = vst.msk [vmem:[#allocation3 + $0xa8] sm:$0xff] %vm1195, %v1142
        %1218 = vst.msk [vmem:[#allocation3 + $0xb0] sm:$0xff] %vm1195, %v1144
        %1219 = vst.msk [vmem:[#allocation3 + $0xb8] sm:$0xff] %vm1195, %v1146
        %1220 = vst.msk [vmem:[#allocation3 + $0xc0] sm:$0xff] %vm1195, %v1148
        %1221 = vst.msk [vmem:[#allocation3 + $0xc8] sm:$0xff] %vm1195, %v1150
        %1222 = vst.msk [vmem:[#allocation3 + $0xd0] sm:$0xff] %vm1195, %v1152
        %1223 = vst.msk [vmem:[#allocation3 + $0xd8] sm:$0xff] %vm1195, %v1154
        %1224 = vst.msk [vmem:[#allocation3 + $0xe0] sm:$0xff] %vm1195, %v1156
        %1225 = vst.msk [vmem:[#allocation3 + $0xe8] sm:$0xff] %vm1195, %v1158
        %1226 = vst.msk [vmem:[#allocation3 + $0xf0] sm:$0xff] %vm1195, %v1160
        %1227 = vst.msk [vmem:[#allocation3 + $0xf8] sm:$0xff] %vm1195, %v1162
        %v1228 = vlaneseq
        %vm1229 = vcmp.ge.s32.totalorder %v1228, 0
        %vm1230 = vcmp.lt.s32.totalorder %v1228, 256
        %vm1231 = vmand %vm1229, %vm1230
        %1232 = vst.msk [vmem:[#allocation4] sm:$0x3] %vm1231, 0.0
        loop: start=0, step=1, limit=2
        $region49: #{self_block_forward.1} parent=43 // loop_pre_header
          _
        $region50: #{self_block_forward.1} parent=43 // loop_header
          %s1234 = sphi 0, %s1238
          %p1235 = scmp.ge.s32.totalorder %s1234, 2
        $region51: #{self_block_forward.1} parent=43 // loop_header_branch
          %1237 = sbr.rel (%p1235) target = $region55
        $region52: #{self_block_forward.1} parent=43 // loop_body
          %s1239 = smul.u32 %s1234, 128
          %s1240 = sshra.s32 %s1239, 4
          %s1241 = sand.u32 %s1239, 15
          %s1242 = smul.addr %s1240, 8
          %s1243 = scalar_lea.vmem [#allocation2], %s1242
          %v1244 = vld [vmem:[%s1243] sm:$0xff]
          %v1245 = vld [vmem:[%s1243 + $0x8] sm:$0xff]
          %v1246 = vld [vmem:[%s1243 + $0x10] sm:$0xff]
          %v1247 = vld [vmem:[%s1243 + $0x18] sm:$0xff]
          %v1248 = vld [vmem:[%s1243 + $0x20] sm:$0xff]
          %v1249 = vld [vmem:[%s1243 + $0x28] sm:$0xff]
          %v1250 = vld [vmem:[%s1243 + $0x30] sm:$0xff]
          %v1251 = vld [vmem:[%s1243 + $0x38] sm:$0xff]
          %1268 = vrot.lane.b32.xlu0 %v1034, 124
          %v1269 = vpop.permute.xlu0 %1268
          %1270 = vrot.lane.b32.xlu0 %v1035, 124
          %v1271 = vpop.permute.xlu0 %1270
          %1272 = vrot.lane.b32.xlu0 %v1036, 124
          %v1273 = vpop.permute.xlu0 %1272
          %1274 = vrot.lane.b32.xlu0 %v1037, 124
          %v1275 = vpop.permute.xlu0 %1274
          %1276 = vrot.lane.b32.xlu0 %v1038, 124
          %v1277 = vpop.permute.xlu0 %1276
          %1278 = vrot.lane.b32.xlu0 %v1039, 124
          %v1279 = vpop.permute.xlu0 %1278
          %1280 = vrot.lane.b32.xlu0 %v1040, 124
          %v1281 = vpop.permute.xlu0 %1280
          %1282 = vrot.lane.b32.xlu0 %v1041, 124
          %v1283 = vpop.permute.xlu0 %1282
          %1284 = vrot.lane.b32.xlu0 %v1042, 124
          %v1285 = vpop.permute.xlu0 %1284
          %1286 = vrot.lane.b32.xlu0 %v1043, 124
          %v1287 = vpop.permute.xlu0 %1286
          %1288 = vrot.lane.b32.xlu0 %v1044, 124
          %v1289 = vpop.permute.xlu0 %1288
          %1290 = vrot.lane.b32.xlu0 %v1045, 124
          %v1291 = vpop.permute.xlu0 %1290
          %1292 = vrot.lane.b32.xlu0 %v1046, 124
          %v1293 = vpop.permute.xlu0 %1292
          %1294 = vrot.lane.b32.xlu0 %v1047, 124
          %v1295 = vpop.permute.xlu0 %1294
          %1296 = vrot.lane.b32.xlu0 %v1048, 124
          %v1297 = vpop.permute.xlu0 %1296
          %1298 = vrot.lane.b32.xlu0 %v1049, 124
          %v1299 = vpop.permute.xlu0 %1298
          %v1301 = vsel %vm1050, %v1244, 0
          %v1304 = vsel %vm1050, %v1245, 0
          %v1307 = vsel %vm1050, %v1246, 0
          %v1310 = vsel %vm1050, %v1247, 0
          %v1313 = vsel %vm1050, %v1248, 0
          %v1316 = vsel %vm1050, %v1249, 0
          %v1319 = vsel %vm1050, %v1250, 0
          %v1322 = vsel %vm1050, %v1251, 0
          %v1325 = vsel %vm1050, %v1269, 0
          %v1328 = vsel %vm1050, %v1271, 0
          %v1331 = vsel %vm1050, %v1273, 0
          %v1334 = vsel %vm1050, %v1275, 0
          %v1337 = vsel %vm1050, %v1277, 0
          %v1340 = vsel %vm1050, %v1279, 0
          %v1343 = vsel %vm1050, %v1281, 0
          %v1346 = vsel %vm1050, %v1283, 0
          %v1349 = vsel %vm1050, %v1285, 0
          %v1352 = vsel %vm1050, %v1287, 0
          %v1355 = vsel %vm1050, %v1289, 0
          %v1358 = vsel %vm1050, %v1291, 0
          %v1361 = vsel %vm1050, %v1293, 0
          %v1364 = vsel %vm1050, %v1295, 0
          %v1367 = vsel %vm1050, %v1297, 0
          %v1370 = vsel %vm1050, %v1299, 0
          %1372 = vmatprep.subr.bf16.mxu0 0
          %1373 = vmatpush1.bf16.xpose.msra.mxu0 %v1325
          %1374 = vmatprep.subr.bf16.mxu0 0
          %1375 = vmatpush1.bf16.xpose.msra.mxu0 %v1328
          %1376 = vmatprep.subr.bf16.mxu0 0
          %1377 = vmatpush1.bf16.xpose.msra.mxu0 %v1331
          %1378 = vmatprep.subr.bf16.mxu0 0
          %1379 = vmatpush1.bf16.xpose.msra.mxu0 %v1334
          %1380 = vmatprep.subr.bf16.mxu0 0
          %1381 = vmatpush1.bf16.xpose.msra.mxu0 %v1337
          %1382 = vmatprep.subr.bf16.mxu0 0
          %1383 = vmatpush1.bf16.xpose.msra.mxu0 %v1340
          %1384 = vmatprep.subr.bf16.mxu0 0
          %1385 = vmatpush1.bf16.xpose.msra.mxu0 %v1343
          %1386 = vmatprep.subr.bf16.mxu0 0
          %1387 = vmatpush1.bf16.xpose.msra.mxu0 %v1346
          %1388 = vmatprep.subr.bf16.mxu0 0
          %1389 = vmatpush1.bf16.xpose.msra.mxu0 %v1349
          %1390 = vmatprep.subr.bf16.mxu0 0
          %1391 = vmatpush1.bf16.xpose.msra.mxu0 %v1352
          %1392 = vmatprep.subr.bf16.mxu0 0
          %1393 = vmatpush1.bf16.xpose.msra.mxu0 %v1355
          %1394 = vmatprep.subr.bf16.mxu0 0
          %1395 = vmatpush1.bf16.xpose.msra.mxu0 %v1358
          %1396 = vmatprep.subr.bf16.mxu0 0
          %1397 = vmatpush1.bf16.xpose.msra.mxu0 %v1361
          %1398 = vmatprep.subr.bf16.mxu0 0
          %1399 = vmatpush1.bf16.xpose.msra.mxu0 %v1364
          %1400 = vmatprep.subr.bf16.mxu0 0
          %1401 = vmatpush1.bf16.xpose.msra.mxu0 %v1367
          %1402 = vmatprep.subr.bf16.mxu0 0
          %1403 = vmatpush1.bf16.xpose.msra.mxu0 %v1370
          %1404 = vmatprep.mubr.bf16.mxu0 0
          %1405 = vmatmul.mubr.bf16.gmra.mrb[0].mxu0 %v1301
          %v1406 = vpop.f32.mrb[0].mxu0
          %v1407 = vadd.f32 0.0, %v1406
          %v1408 = vpop.f32.mrb[0].mxu0
          %v1409 = vadd.f32 0.0, %v1408
          %v1410 = vpop.f32.mrb[0].mxu0
          %v1411 = vadd.f32 0.0, %v1410
          %v1412 = vpop.f32.mrb[0].mxu0
          %v1413 = vadd.f32 0.0, %v1412
          %1414 = vmatprep.mubr.bf16.mxu0 0
          %1415 = vmatmul.mubr.bf16.gmra.mrb[0].mxu0 %v1304
          %v1416 = vpop.f32.mrb[0].mxu0
          %v1417 = vadd.f32 0.0, %v1416
          %v1418 = vpop.f32.mrb[0].mxu0
          %v1419 = vadd.f32 0.0, %v1418
          %v1420 = vpop.f32.mrb[0].mxu0
          %v1421 = vadd.f32 0.0, %v1420
          %v1422 = vpop.f32.mrb[0].mxu0
          %v1423 = vadd.f32 0.0, %v1422
          %1424 = vmatprep.mubr.bf16.mxu0 0
          %1425 = vmatmul.mubr.bf16.gmra.mrb[0].mxu0 %v1307
          %v1426 = vpop.f32.mrb[0].mxu0
          %v1427 = vadd.f32 0.0, %v1426
          %v1428 = vpop.f32.mrb[0].mxu0
          %v1429 = vadd.f32 0.0, %v1428
          %v1430 = vpop.f32.mrb[0].mxu0
          %v1431 = vadd.f32 0.0, %v1430
          %v1432 = vpop.f32.mrb[0].mxu0
          %v1433 = vadd.f32 0.0, %v1432
          %1434 = vmatprep.mubr.bf16.mxu0 0
          %1435 = vmatmul.mubr.bf16.gmra.mrb[0].mxu0 %v1310
          %v1436 = vpop.f32.mrb[0].mxu0
          %v1437 = vadd.f32 0.0, %v1436
          %v1438 = vpop.f32.mrb[0].mxu0
          %v1439 = vadd.f32 0.0, %v1438
          %v1440 = vpop.f32.mrb[0].mxu0
          %v1441 = vadd.f32 0.0, %v1440
          %v1442 = vpop.f32.mrb[0].mxu0
          %v1443 = vadd.f32 0.0, %v1442
          %1444 = vmatprep.mubr.bf16.mxu0 0
          %1445 = vmatmul.mubr.bf16.gmra.mrb[0].mxu0 %v1313
          %v1446 = vpop.f32.mrb[0].mxu0
          %v1447 = vadd.f32 0.0, %v1446
          %v1448 = vpop.f32.mrb[0].mxu0
          %v1449 = vadd.f32 0.0, %v1448
          %v1450 = vpop.f32.mrb[0].mxu0
          %v1451 = vadd.f32 0.0, %v1450
          %v1452 = vpop.f32.mrb[0].mxu0
          %v1453 = vadd.f32 0.0, %v1452
          %1454 = vmatprep.mubr.bf16.mxu0 0
          %1455 = vmatmul.mubr.bf16.gmra.mrb[0].mxu0 %v1316
          %v1456 = vpop.f32.mrb[0].mxu0
          %v1457 = vadd.f32 0.0, %v1456
          %v1458 = vpop.f32.mrb[0].mxu0
          %v1459 = vadd.f32 0.0, %v1458
          %v1460 = vpop.f32.mrb[0].mxu0
          %v1461 = vadd.f32 0.0, %v1460
          %v1462 = vpop.f32.mrb[0].mxu0
          %v1463 = vadd.f32 0.0, %v1462
          %1464 = vmatprep.mubr.bf16.mxu0 0
          %1465 = vmatmul.mubr.bf16.gmra.mrb[0].mxu0 %v1319
          %v1466 = vpop.f32.mrb[0].mxu0
          %v1467 = vadd.f32 0.0, %v1466
          %v1468 = vpop.f32.mrb[0].mxu0
          %v1469 = vadd.f32 0.0, %v1468
          %v1470 = vpop.f32.mrb[0].mxu0
          %v1471 = vadd.f32 0.0, %v1470
          %v1472 = vpop.f32.mrb[0].mxu0
          %v1473 = vadd.f32 0.0, %v1472
          %1474 = vmatprep.mubr.bf16.mxu0 0
          %1475 = vmatmul.mubr.bf16.gmra.mrb[0].mxu0 %v1322
          %v1476 = vpop.f32.mrb[0].mxu0
          %v1477 = vadd.f32 0.0, %v1476
          %v1478 = vpop.f32.mrb[0].mxu0
          %v1479 = vadd.f32 0.0, %v1478
          %v1480 = vpop.f32.mrb[0].mxu0
          %v1481 = vadd.f32 0.0, %v1480
          %v1482 = vpop.f32.mrb[0].mxu0
          %v1483 = vadd.f32 0.0, %v1482
          %1484 = vdwg.mxu0
          %v1485 = vmax.f32 %v1407, %v1409
          %1486 = vmax.xlane.f32.xlu0 %v1485
          %v1487 = vpop.xlane.xlu0 %1486
          %v1488 = vmax.f32 %v1411, %v1413
          %1489 = vmax.xlane.f32.xlu0 %v1488
          %v1490 = vpop.xlane.xlu0 %1489
          %v1491 = vmax.f32 %v1417, %v1419
          %1492 = vmax.xlane.f32.xlu0 %v1491
          %v1493 = vpop.xlane.xlu0 %1492
          %v1494 = vmax.f32 %v1421, %v1423
          %1495 = vmax.xlane.f32.xlu0 %v1494
          %v1496 = vpop.xlane.xlu0 %1495
          %v1497 = vmax.f32 %v1427, %v1429
          %1498 = vmax.xlane.f32.xlu0 %v1497
          %v1499 = vpop.xlane.xlu0 %1498
          %v1500 = vmax.f32 %v1431, %v1433
          %1501 = vmax.xlane.f32.xlu0 %v1500
          %v1502 = vpop.xlane.xlu0 %1501
          %v1503 = vmax.f32 %v1437, %v1439
          %1504 = vmax.xlane.f32.xlu0 %v1503
          %v1505 = vpop.xlane.xlu0 %1504
          %v1506 = vmax.f32 %v1441, %v1443
          %1507 = vmax.xlane.f32.xlu0 %v1506
          %v1508 = vpop.xlane.xlu0 %1507
          %v1509 = vmax.f32 %v1447, %v1449
          %1510 = vmax.xlane.f32.xlu0 %v1509
          %v1511 = vpop.xlane.xlu0 %1510
          %v1512 = vmax.f32 %v1451, %v1453
          %1513 = vmax.xlane.f32.xlu0 %v1512
          %v1514 = vpop.xlane.xlu0 %1513
          %v1515 = vmax.f32 %v1457, %v1459
          %1516 = vmax.xlane.f32.xlu0 %v1515
          %v1517 = vpop.xlane.xlu0 %1516
          %v1518 = vmax.f32 %v1461, %v1463
          %1519 = vmax.xlane.f32.xlu0 %v1518
          %v1520 = vpop.xlane.xlu0 %1519
          %v1521 = vmax.f32 %v1467, %v1469
          %1522 = vmax.xlane.f32.xlu0 %v1521
          %v1523 = vpop.xlane.xlu0 %1522
          %v1524 = vmax.f32 %v1471, %v1473
          %1525 = vmax.xlane.f32.xlu0 %v1524
          %v1526 = vpop.xlane.xlu0 %1525
          %v1527 = vmax.f32 %v1477, %v1479
          %1528 = vmax.xlane.f32.xlu0 %v1527
          %v1529 = vpop.xlane.xlu0 %1528
          %v1530 = vmax.f32 %v1481, %v1483
          %1531 = vmax.xlane.f32.xlu0 %v1530
          %v1532 = vpop.xlane.xlu0 %1531
          %v1533 = vsub.f32 %v1407, %v1487
          %v1534 = vsub.f32 %v1409, %v1487
          %v1535 = vsub.f32 %v1411, %v1490
          %v1536 = vsub.f32 %v1413, %v1490
          %v1537 = vsub.f32 %v1417, %v1493
          %v1538 = vsub.f32 %v1419, %v1493
          %v1539 = vsub.f32 %v1421, %v1496
          %v1540 = vsub.f32 %v1423, %v1496
          %v1541 = vsub.f32 %v1427, %v1499
          %v1542 = vsub.f32 %v1429, %v1499
          %v1543 = vsub.f32 %v1431, %v1502
          %v1544 = vsub.f32 %v1433, %v1502
          %v1545 = vsub.f32 %v1437, %v1505
          %v1546 = vsub.f32 %v1439, %v1505
          %v1547 = vsub.f32 %v1441, %v1508
          %v1548 = vsub.f32 %v1443, %v1508
          %v1549 = vsub.f32 %v1447, %v1511
          %v1550 = vsub.f32 %v1449, %v1511
          %v1551 = vsub.f32 %v1451, %v1514
          %v1552 = vsub.f32 %v1453, %v1514
          %v1553 = vsub.f32 %v1457, %v1517
          %v1554 = vsub.f32 %v1459, %v1517
          %v1555 = vsub.f32 %v1461, %v1520
          %v1556 = vsub.f32 %v1463, %v1520
          %v1557 = vsub.f32 %v1467, %v1523
          %v1558 = vsub.f32 %v1469, %v1523
          %v1559 = vsub.f32 %v1471, %v1526
          %v1560 = vsub.f32 %v1473, %v1526
          %v1561 = vsub.f32 %v1477, %v1529
          %v1562 = vsub.f32 %v1479, %v1529
          %v1563 = vsub.f32 %v1481, %v1532
          %v1564 = vsub.f32 %v1483, %v1532
          %v1565 = vmul.f32 %v1533, 1.442695
          %v1566 = vpow.pop %v1565
          %v1567 = vmul.f32 %v1534, 1.442695
          %v1568 = vpow.pop %v1567
          %v1569 = vmul.f32 %v1535, 1.442695
          %v1570 = vpow.pop %v1569
          %v1571 = vmul.f32 %v1536, 1.442695
          %v1572 = vpow.pop %v1571
          %v1573 = vmul.f32 %v1537, 1.442695
          %v1574 = vpow.pop %v1573
          %v1575 = vmul.f32 %v1538, 1.442695
          %v1576 = vpow.pop %v1575
          %v1577 = vmul.f32 %v1539, 1.442695
          %v1578 = vpow.pop %v1577
          %v1579 = vmul.f32 %v1540, 1.442695
          %v1580 = vpow.pop %v1579
          %v1581 = vmul.f32 %v1541, 1.442695
          %v1582 = vpow.pop %v1581
          %v1583 = vmul.f32 %v1542, 1.442695
          %v1584 = vpow.pop %v1583
          %v1585 = vmul.f32 %v1543, 1.442695
          %v1586 = vpow.pop %v1585
          %v1587 = vmul.f32 %v1544, 1.442695
          %v1588 = vpow.pop %v1587
          %v1589 = vmul.f32 %v1545, 1.442695
          %v1590 = vpow.pop %v1589
          %v1591 = vmul.f32 %v1546, 1.442695
          %v1592 = vpow.pop %v1591
          %v1593 = vmul.f32 %v1547, 1.442695
          %v1594 = vpow.pop %v1593
          %v1595 = vmul.f32 %v1548, 1.442695
          %v1596 = vpow.pop %v1595
          %v1597 = vmul.f32 %v1549, 1.442695
          %v1598 = vpow.pop %v1597
          %v1599 = vmul.f32 %v1550, 1.442695
          %v1600 = vpow.pop %v1599
          %v1601 = vmul.f32 %v1551, 1.442695
          %v1602 = vpow.pop %v1601
          %v1603 = vmul.f32 %v1552, 1.442695
          %v1604 = vpow.pop %v1603
          %v1605 = vmul.f32 %v1553, 1.442695
          %v1606 = vpow.pop %v1605
          %v1607 = vmul.f32 %v1554, 1.442695
          %v1608 = vpow.pop %v1607
          %v1609 = vmul.f32 %v1555, 1.442695
          %v1610 = vpow.pop %v1609
          %v1611 = vmul.f32 %v1556, 1.442695
          %v1612 = vpow.pop %v1611
          %v1613 = vmul.f32 %v1557, 1.442695
          %v1614 = vpow.pop %v1613
          %v1615 = vmul.f32 %v1558, 1.442695
          %v1616 = vpow.pop %v1615
          %v1617 = vmul.f32 %v1559, 1.442695
          %v1618 = vpow.pop %v1617
          %v1619 = vmul.f32 %v1560, 1.442695
          %v1620 = vpow.pop %v1619
          %v1621 = vmul.f32 %v1561, 1.442695
          %v1622 = vpow.pop %v1621
          %v1623 = vmul.f32 %v1562, 1.442695
          %v1624 = vpow.pop %v1623
          %v1625 = vmul.f32 %v1563, 1.442695
          %v1626 = vpow.pop %v1625
          %v1627 = vmul.f32 %v1564, 1.442695
          %v1628 = vpow.pop %v1627
          %v1629 = vadd.f32 %v1566, %v1568
          %1630 = vadd.xlane.f32.xlu0 %v1629
          %v1631 = vpop.xlane.xlu0 %1630
          %v1632 = vadd.f32 %v1570, %v1572
          %1633 = vadd.xlane.f32.xlu0 %v1632
          %v1634 = vpop.xlane.xlu0 %1633
          %v1635 = vadd.f32 %v1574, %v1576
          %1636 = vadd.xlane.f32.xlu0 %v1635
          %v1637 = vpop.xlane.xlu0 %1636
          %v1638 = vadd.f32 %v1578, %v1580
          %1639 = vadd.xlane.f32.xlu0 %v1638
          %v1640 = vpop.xlane.xlu0 %1639
          %v1641 = vadd.f32 %v1582, %v1584
          %1642 = vadd.xlane.f32.xlu0 %v1641
          %v1643 = vpop.xlane.xlu0 %1642
          %v1644 = vadd.f32 %v1586, %v1588
          %1645 = vadd.xlane.f32.xlu0 %v1644
          %v1646 = vpop.xlane.xlu0 %1645
          %v1647 = vadd.f32 %v1590, %v1592
          %1648 = vadd.xlane.f32.xlu0 %v1647
          %v1649 = vpop.xlane.xlu0 %1648
          %v1650 = vadd.f32 %v1594, %v1596
          %1651 = vadd.xlane.f32.xlu0 %v1650
          %v1652 = vpop.xlane.xlu0 %1651
          %v1653 = vadd.f32 %v1598, %v1600
          %1654 = vadd.xlane.f32.xlu0 %v1653
          %v1655 = vpop.xlane.xlu0 %1654
          %v1656 = vadd.f32 %v1602, %v1604
          %1657 = vadd.xlane.f32.xlu0 %v1656
          %v1658 = vpop.xlane.xlu0 %1657
          %v1659 = vadd.f32 %v1606, %v1608
          %1660 = vadd.xlane.f32.xlu0 %v1659
          %v1661 = vpop.xlane.xlu0 %1660
          %v1662 = vadd.f32 %v1610, %v1612
          %1663 = vadd.xlane.f32.xlu0 %v1662
          %v1664 = vpop.xlane.xlu0 %1663
          %v1665 = vadd.f32 %v1614, %v1616
          %1666 = vadd.xlane.f32.xlu0 %v1665
          %v1667 = vpop.xlane.xlu0 %1666
          %v1668 = vadd.f32 %v1618, %v1620
          %1669 = vadd.xlane.f32.xlu0 %v1668
          %v1670 = vpop.xlane.xlu0 %1669
          %v1671 = vadd.f32 %v1622, %v1624
          %1672 = vadd.xlane.f32.xlu0 %v1671
          %v1673 = vpop.xlane.xlu0 %1672
          %v1674 = vadd.f32 %v1626, %v1628
          %1675 = vadd.xlane.f32.xlu0 %v1674
          %v1676 = vpop.xlane.xlu0 %1675
          %s1677 = scalar_lea.vmem [#allocation3], %s1239
          %v1678 = vld [vmem:[%s1677] sm:$0xff]
          %v1679 = vld [vmem:[%s1677 + $0x8] sm:$0xff]
          %v1680 = vld [vmem:[%s1677 + $0x10] sm:$0xff]
          %v1681 = vld [vmem:[%s1677 + $0x18] sm:$0xff]
          %v1682 = vld [vmem:[%s1677 + $0x20] sm:$0xff]
          %v1683 = vld [vmem:[%s1677 + $0x28] sm:$0xff]
          %v1684 = vld [vmem:[%s1677 + $0x30] sm:$0xff]
          %v1685 = vld [vmem:[%s1677 + $0x38] sm:$0xff]
          %v1686 = vld [vmem:[%s1677 + $0x40] sm:$0xff]
          %v1687 = vld [vmem:[%s1677 + $0x48] sm:$0xff]
          %v1688 = vld [vmem:[%s1677 + $0x50] sm:$0xff]
          %v1689 = vld [vmem:[%s1677 + $0x58] sm:$0xff]
          %v1690 = vld [vmem:[%s1677 + $0x60] sm:$0xff]
          %v1691 = vld [vmem:[%s1677 + $0x68] sm:$0xff]
          %v1692 = vld [vmem:[%s1677 + $0x70] sm:$0xff]
          %v1693 = vld [vmem:[%s1677 + $0x78] sm:$0xff]
          %v1694 = vrcp.pop %v1631
          %v1695 = vrcp.pop %v1634
          %v1696 = vrcp.pop %v1637
          %v1697 = vrcp.pop %v1640
          %v1698 = vrcp.pop %v1643
          %v1699 = vrcp.pop %v1646
          %v1700 = vrcp.pop %v1649
          %v1701 = vrcp.pop %v1652
          %v1702 = vrcp.pop %v1655
          %v1703 = vrcp.pop %v1658
          %v1704 = vrcp.pop %v1661
          %v1705 = vrcp.pop %v1664
          %v1706 = vrcp.pop %v1667
          %v1707 = vrcp.pop %v1670
          %v1708 = vrcp.pop %v1673
          %v1709 = vrcp.pop %v1676
          %v1710 = vmul.f32 %v1678, %v1694
          %v1711 = vmul.f32 %v1679, %v1695
          %v1712 = vmul.f32 %v1680, %v1696
          %v1713 = vmul.f32 %v1681, %v1697
          %v1714 = vmul.f32 %v1682, %v1698
          %v1715 = vmul.f32 %v1683, %v1699
          %v1716 = vmul.f32 %v1684, %v1700
          %v1717 = vmul.f32 %v1685, %v1701
          %v1718 = vmul.f32 %v1686, %v1702
          %v1719 = vmul.f32 %v1687, %v1703
          %v1720 = vmul.f32 %v1688, %v1704
          %v1721 = vmul.f32 %v1689, %v1705
          %v1722 = vmul.f32 %v1690, %v1706
          %v1723 = vmul.f32 %v1691, %v1707
          %v1724 = vmul.f32 %v1692, %v1708
          %v1725 = vmul.f32 %v1693, %v1709
          %v1726 = vld [vmem:[#allocation4] sm:$0x3]
          %1728 = vset.pattern.permute.xlu0 0
          %1729 = vperm.xlu0 %1728, %v1710
          %v1730 = vpop.permute.xlu0 %1729
          %1733 = vset.pattern.permute.xlu0 0
          %1734 = vperm.xlu0 %1733, %v1711
          %v1735 = vpop.permute.xlu0 %1734
          %1738 = vset.pattern.permute.xlu0 0
          %1739 = vperm.xlu0 %1738, %v1712
          %v1740 = vpop.permute.xlu0 %1739
          %1743 = vset.pattern.permute.xlu0 0
          %1744 = vperm.xlu0 %1743, %v1713
          %v1745 = vpop.permute.xlu0 %1744
          %1748 = vset.pattern.permute.xlu0 0
          %1749 = vperm.xlu0 %1748, %v1714
          %v1750 = vpop.permute.xlu0 %1749
          %1753 = vset.pattern.permute.xlu0 0
          %1754 = vperm.xlu0 %1753, %v1715
          %v1755 = vpop.permute.xlu0 %1754
          %1758 = vset.pattern.permute.xlu0 0
          %1759 = vperm.xlu0 %1758, %v1716
          %v1760 = vpop.permute.xlu0 %1759
          %1763 = vset.pattern.permute.xlu0 0
          %1764 = vperm.xlu0 %1763, %v1717
          %v1765 = vpop.permute.xlu0 %1764
          %1768 = vset.pattern.permute.xlu0 0
          %1769 = vperm.xlu0 %1768, %v1718
          %v1770 = vpop.permute.xlu0 %1769
          %1773 = vset.pattern.permute.xlu0 0
          %1774 = vperm.xlu0 %1773, %v1719
          %v1775 = vpop.permute.xlu0 %1774
          %1778 = vset.pattern.permute.xlu0 0
          %1779 = vperm.xlu0 %1778, %v1720
          %v1780 = vpop.permute.xlu0 %1779
          %1783 = vset.pattern.permute.xlu0 0
          %1784 = vperm.xlu0 %1783, %v1721
          %v1785 = vpop.permute.xlu0 %1784
          %1788 = vset.pattern.permute.xlu0 0
          %1789 = vperm.xlu0 %1788, %v1722
          %v1790 = vpop.permute.xlu0 %1789
          %1793 = vset.pattern.permute.xlu0 0
          %1794 = vperm.xlu0 %1793, %v1723
          %v1795 = vpop.permute.xlu0 %1794
          %1798 = vset.pattern.permute.xlu0 0
          %1799 = vperm.xlu0 %1798, %v1724
          %v1800 = vpop.permute.xlu0 %1799
          %1803 = vset.pattern.permute.xlu0 0
          %1804 = vperm.xlu0 %1803, %v1725
          %v1805 = vpop.permute.xlu0 %1804
          %v1807 = vmul.f32 %v1566, %v1730
          %v1808 = vmul.f32 %v1568, %v1730
          %v1809 = vmul.f32 %v1570, %v1735
          %v1810 = vmul.f32 %v1572, %v1735
          %v1811 = vmul.f32 %v1574, %v1740
          %v1812 = vmul.f32 %v1576, %v1740
          %v1813 = vmul.f32 %v1578, %v1745
          %v1814 = vmul.f32 %v1580, %v1745
          %v1815 = vmul.f32 %v1582, %v1750
          %v1816 = vmul.f32 %v1584, %v1750
          %v1817 = vmul.f32 %v1586, %v1755
          %v1818 = vmul.f32 %v1588, %v1755
          %v1819 = vmul.f32 %v1590, %v1760
          %v1820 = vmul.f32 %v1592, %v1760
          %v1821 = vmul.f32 %v1594, %v1765
          %v1822 = vmul.f32 %v1596, %v1765
          %v1823 = vmul.f32 %v1598, %v1770
          %v1824 = vmul.f32 %v1600, %v1770
          %v1825 = vmul.f32 %v1602, %v1775
          %v1826 = vmul.f32 %v1604, %v1775
          %v1827 = vmul.f32 %v1606, %v1780
          %v1828 = vmul.f32 %v1608, %v1780
          %v1829 = vmul.f32 %v1610, %v1785
          %v1830 = vmul.f32 %v1612, %v1785
          %v1831 = vmul.f32 %v1614, %v1790
          %v1832 = vmul.f32 %v1616, %v1790
          %v1833 = vmul.f32 %v1618, %v1795
          %v1834 = vmul.f32 %v1620, %v1795
          %v1835 = vmul.f32 %v1622, %v1800
          %v1836 = vmul.f32 %v1624, %v1800
          %v1837 = vmul.f32 %v1626, %v1805
          %v1838 = vmul.f32 %v1628, %v1805
          %v1839 = vadd.f32 %v1807, %v1809
          %v1840 = vadd.f32 %v1839, %v1811
          %v1841 = vadd.f32 %v1840, %v1813
          %v1842 = vadd.f32 %v1841, %v1815
          %v1843 = vadd.f32 %v1842, %v1817
          %v1844 = vadd.f32 %v1843, %v1819
          %v1845 = vadd.f32 %v1844, %v1821
          %v1846 = vadd.f32 %v1845, %v1823
          %v1847 = vadd.f32 %v1846, %v1825
          %v1848 = vadd.f32 %v1847, %v1827
          %v1849 = vadd.f32 %v1848, %v1829
          %v1850 = vadd.f32 %v1849, %v1831
          %v1851 = vadd.f32 %v1850, %v1833
          %v1852 = vadd.f32 %v1851, %v1835
          %v1853 = vadd.f32 %v1852, %v1837
          %v1854 = vrot.slane %v1853, 4
          %v1855 = vadd.f32 %v1853, %v1854
          %v1856 = vrot.slane %v1855, 2
          %v1857 = vadd.f32 %v1855, %v1856
          %v1858 = vrot.slane %v1857, 1
          %v1859 = vadd.f32 %v1857, %v1858
          %v1860 = vadd.f32 %v1808, %v1810
          %v1861 = vadd.f32 %v1860, %v1812
          %v1862 = vadd.f32 %v1861, %v1814
          %v1863 = vadd.f32 %v1862, %v1816
          %v1864 = vadd.f32 %v1863, %v1818
          %v1865 = vadd.f32 %v1864, %v1820
          %v1866 = vadd.f32 %v1865, %v1822
          %v1867 = vadd.f32 %v1866, %v1824
          %v1868 = vadd.f32 %v1867, %v1826
          %v1869 = vadd.f32 %v1868, %v1828
          %v1870 = vadd.f32 %v1869, %v1830
          %v1871 = vadd.f32 %v1870, %v1832
          %v1872 = vadd.f32 %v1871, %v1834
          %v1873 = vadd.f32 %v1872, %v1836
          %v1874 = vadd.f32 %v1873, %v1838
          %v1875 = vrot.slane %v1874, 4
          %v1876 = vadd.f32 %v1874, %v1875
          %v1877 = vrot.slane %v1876, 2
          %v1878 = vadd.f32 %v1876, %v1877
          %v1879 = vrot.slane %v1878, 1
          %v1880 = vadd.f32 %v1878, %v1879
          %v1883 = vcombine.low %v1859, %v1880
          %v1885 = vunpack.c.l.s4 1966171168
          %v1886 = vunpack.c.0.s8 %v1885
          %v1887 = vlaneseq
          %v1888 = vshrl.u32 %v1887, 7
          %v1889 = vsub.s32 %v1886, %v1888
          %v1890 = vrot.slane %v1883, %v1889
          %v1892 = vunpack.c.l.s4 1966171168
          %v1893 = vunpack.c.0.s8 %v1892
          %v1894 = vlaneseq
          %v1895 = vshrl.u32 %v1894, 7
          %v1896 = vsub.s32 %v1893, %v1895
          %v1897 = vrot.slane %v1890, %v1896
          %v1899 = vadd.f32 %v1726, %v1897
          %1900 = vst.msk [vmem:[#allocation4] sm:$0x3] %vm1231, %v1899
        $region53: #{self_block_forward.1} parent=43 // loop_footer
          %s1238 = sadd.s32 1, %s1234
        $region54: #{self_block_forward.1} parent=43 // loop_footer_branch
          %1233 = sbr.rel target = $region50
        $region55: #{self_block_forward.1} parent=43 // loop_exit
          _
        %s1901 = sld [smem:[#allocation5]]
        %s1902 = sld [smem:[#allocation5 + $0x1]]
        %v1903 = vld [vmem:[#allocation4] sm:$0x3]
        %v1904 = vstv %s1901
        %v1905 = vmul.f32 %v1904, %v1903
        %v1908 = vcombine.low %v785, %v787
        %v1910 = vunpack.c.l.s4 1966171168
        %v1911 = vunpack.c.0.s8 %v1910
        %v1912 = vlaneseq
        %v1913 = vshrl.u32 %v1912, 7
        %v1914 = vsub.s32 %v1911, %v1913
        %v1915 = vrot.slane %v1908, %v1914
        %v1917 = vunpack.c.l.s4 1966171168
        %v1918 = vunpack.c.0.s8 %v1917
        %v1919 = vlaneseq
        %v1920 = vshrl.u32 %v1919, 7
        %v1921 = vsub.s32 %v1918, %v1920
        %v1922 = vrot.slane %v1915, %v1921
        %v1924 = vadd.f32 %v1905, %v1922
        %v1925 = vstv %s1902
        %v1926 = vadd.f32 %v1924, %v1925
        %1927 = vst.msk [vmem:[%s263] sm:$0x3] %vm1231, %v1926
        %p1928 = scmp.lt.s32.totalorder %s18, 1
        %s1929 = scalar_select %p1928, %s18, 1
        %s1930 = smul.addr %s1929, 2
        %s1931 = scalar_lea.vmem %s6, %s1930
        // Predicated region
        $region56: #{self_block_forward.1} parent=43 // pred_check
          %p1932 = pneg %p167
        $region57: #{self_block_forward.1} parent=43 // pred_check_branch
          %1934 = sbr.rel (%p1932) target = $region59
        $region58: #{self_block_forward.1} parent=43 // pred_region
          _
        $region59: #{self_block_forward.1} parent=43 // pred_fallthru
          _
      $region44: #{self_block_forward.1} parent=5 // pred_fallthru
        _
      %p1935 = scmp.le.s32.totalorder 2, %s13
      // Predicated region
      $region60: #{self_block_forward.1} parent=5 // pred_check
        %p1936 = pneg %p1935
      $region61: #{self_block_forward.1} parent=5 // pred_check_branch
        %1938 = sbr.rel (%p1936) target = $region63
      $region62: #{self_block_forward.1} parent=5 // pred_region
        %s1939 = ssub.s32 %s13, 2
        // Predicated region
        $region64: #{self_block_forward.1} parent=62 // pred_check
          %p1940 = pneg %p173
        $region65: #{self_block_forward.1} parent=62 // pred_check_branch
          %1942 = sbr.rel (%p1940) target = $region67
        $region66: #{self_block_forward.1} parent=62 // pred_region
          %p1943 = scmp.lt.s32.totalorder %s19, 1
          %s1944 = scalar_select %p1943, %s19, 1
          %s1945 = smul.addr %s1944, 2
          %s1946 = scalar_lea.vmem %s6, %s1945
        $region67: #{self_block_forward.1} parent=62 // pred_fallthru
          _
      $region63: #{self_block_forward.1} parent=5 // pred_fallthru
        _
    $region6: #{self_block_forward.1} parent=1 // loop_footer
      %s17 = sadd.s32 1, %s13
    $region7: #{self_block_forward.1} parent=1 // loop_footer_branch
      %12 = sbr.rel target = $region3
    $region8: #{self_block_forward.1} parent=1 // loop_exit
      _
    %1947 = vsyncpa [#allocation6], 1
    %s1948 = scalar_lea.sflag [#allocation6], 1
    %1949 = vsyncpa %s1948, 1

</llo_original>
